<compile_context>
chip_gen: v5e
topology: v5e:2x2
jax: 0.10.0
libtpu: 0.0.40
codegen_flags: <defaults>
</compile_context>

<pallas_src>
import functools

import jax
import jax.numpy as jnp
from jax.experimental import pallas as pl
from jax.experimental.pallas import tpu as pltpu

LANE = 128


def _round_up(x, m):
    return ((x + m - 1) // m) * m


# ------------------------------ fused kernel ------------------------------- #

def _make_fused_kernel(P0, K2, n_conv2, n_dense):
    """Fused per-batch-element kernel (one grid step == one batch element)."""

    def kernel(*refs):
        p_ref, w1_ref, b1_ref = refs[0], refs[1], refs[2]
        rest = refs[3:]
        conv_refs = [(rest[2 * i], rest[2 * i + 1]) for i in range(n_conv2)]
        rest = rest[2 * n_conv2:]
        dense_refs = [(rest[2 * i], rest[2 * i + 1]) for i in range(n_dense)]
        wp_ref, bp_ref, o_ref = rest[2 * n_dense:]

        # ---- conv1: single im2col matmul (P0, kpad) @ (kpad, cpad).
        patches = p_ref[0]                                       # (P0, kpad) bf16
        h = jnp.dot(patches, w1_ref[...],
                    preferred_element_type=jnp.float32)          # (P0, cpad) f32
        h = jnp.maximum(h + b1_ref[...], 0.0)

        # ---- K=K2 conv layers: K2 independent per-tap dots, pairwise summed.
        P = P0
        for w_ref, b_ref in conv_refs:
            Pn = P - K2 + 1
            hb = h.astype(jnp.bfloat16)
            parts = [jnp.dot(hb[k:k + Pn, :], w_ref[k],
                             preferred_element_type=jnp.float32)
                     for k in range(K2)]
            acc = functools.reduce(lambda a, b: a + b, parts)
            h = jnp.maximum(acc + b_ref[...], 0.0)               # (Pn, cpad)
            P = Pn

        # ---- global max pool (all rows valid: one batch element per step).
        a = jnp.max(h, axis=0, keepdims=True)                    # (1, cpad)

        # ---- dense stack (folded BN) + prediction layer + stable sigmoid.
        for w_ref, b_ref in dense_refs:
            a = jnp.maximum(
                jnp.dot(a.astype(jnp.bfloat16), w_ref[...],
                        preferred_element_type=jnp.float32) + b_ref[...], 0.0)
        logits = jnp.dot(a.astype(jnp.bfloat16), wp_ref[...],
                         preferred_element_type=jnp.float32) + bp_ref[...]
        z = jnp.clip(logits, -30.0, 30.0)                        # overflow-safe
        o_ref[0] = (1.0 / (1.0 + jnp.exp(-z))).astype(o_ref.dtype)

    return kernel


# ------------------------- parameters & BN folding ------------------------- #

def _fold_bn(gamma, beta, mean, var, eps=1e-5):
    s = gamma / jnp.sqrt(var + eps)
    return s, beta - mean * s


def init_params(key, in_channels=4, num_classes=1, num_filters=64,
                filter_length=25, num_conv_layers=2,
                num_dense_neurons=256, num_dense_layers=2):
    cpad = _round_up(num_filters, LANE)                 # lane-dense channels
    kpad = _round_up(filter_length * in_channels, LANE)  # conv1 contraction
    ncpad = _round_up(num_classes, LANE)                # lane-dense logits
    keys = iter(jax.random.split(key, 64))

    def bn(c):
        return (jax.random.uniform(next(keys), (c,), jnp.float32, 0.5, 1.5),   # gamma
                0.1 * jax.random.normal(next(keys), (c,), jnp.float32),        # beta
                0.1 * jax.random.normal(next(keys), (c,), jnp.float32),        # running_mean
                jax.random.uniform(next(keys), (c,), jnp.float32, 0.5, 1.5))   # running_var

    params = {"meta": dict(in_channels=in_channels, num_classes=num_classes,
                           num_filters=num_filters, filter_length=filter_length,
                           cpad=cpad, kpad=kpad, ncpad=ncpad)}

    # feature-extraction conv: Conv1d(in_channels, F, K1) + BN + ReLU (folded).
    w = 0.05 * jax.random.normal(next(keys),
                                 (num_filters, in_channels, filter_length),
                                 jnp.float32)                                   # torch layout
    b = 0.05 * jax.random.normal(next(keys), (num_filters,), jnp.float32)
    s, t = _fold_bn(*bn(num_filters))
    w_kio = jnp.transpose(w, (2, 1, 0)) * s[None, None, :]                      # (K1, Cin, F)
    w_im2col = w_kio.reshape(filter_length * in_channels, num_filters)
    w_im2col = jnp.pad(w_im2col,
                       ((0, kpad - filter_length * in_channels),
                        (0, cpad - num_filters)))                               # (kpad, cpad)
    bias = jnp.pad(b * s + t, (0, cpad - num_filters))[None, :]                 # (1, cpad)
    params["conv1"] = (w_im2col.astype(jnp.bfloat16), bias)

    # k=3 conv layers, stored per-tap: (3, cpad, cpad).
    params["convs"] = []
    for _ in range(num_conv_layers):
        w = 0.05 * jax.random.normal(next(keys), (num_filters, num_filters, 3),
                                     jnp.float32)
        b = 0.05 * jax.random.normal(next(keys), (num_filters,), jnp.float32)
        s, t = _fold_bn(*bn(num_filters))
        w_kio = jnp.transpose(w, (2, 1, 0)) * s[None, None, :]                  # (3, F, F)
        w_kio = jnp.pad(w_kio, ((0, 0),
                                (0, cpad - num_filters),
                                (0, cpad - num_filters)))                       # (3, cpad, cpad)
        bias = jnp.pad(b * s + t, (0, cpad - num_filters))[None, :]
        params["convs"].append((w_kio.astype(jnp.bfloat16), bias))

    # dense stack: Linear + BN + ReLU (folded).
    params["denses"] = []
    dins = [num_filters] + [num_dense_neurons] * (num_dense_layers - 1)
    for i, din in enumerate(dins):
        w = 0.05 * jax.random.normal(next(keys), (din, num_dense_neurons),
                                     jnp.float32)
        b = 0.05 * jax.random.normal(next(keys), (num_dense_neurons,), jnp.float32)
        s, t = _fold_bn(*bn(num_dense_neurons))
        w = w * s[None, :]
        bias = (b * s + t)[None, :]
        if i == 0:                                   # pooled input is cpad-wide
            w = jnp.pad(w, ((0, cpad - din), (0, 0)))
        params["denses"].append((w.astype(jnp.bfloat16), bias))

    # prediction layer (Linear + Sigmoid); classes padded to a full lane.
    wp = 0.05 * jax.random.normal(next(keys), (num_dense_neurons, num_classes),
                                  jnp.float32)
    bp = 0.05 * jax.random.normal(next(keys), (num_classes,), jnp.float32)
    wp = jnp.pad(wp, ((0, 0), (0, ncpad - num_classes)))
    bp = jnp.pad(bp, (0, ncpad - num_classes))[None, :]
    params["pred"] = (wp.astype(jnp.bfloat16), bp)
    return params


# --------------------------------- forward --------------------------------- #

def _im2col_patches(x_ncl, K1, kpad):
    """(N, Cin, L) -> (N, P0, kpad) bf16 im2col patches (layout plumbing)."""
    N, Cin, L = x_ncl.shape
    P0 = L - K1 + 1
    x_nlc = jnp.transpose(x_ncl, (0, 2, 1)).astype(jnp.float32)          # (N, L, Cin)
    patches = jnp.concatenate([x_nlc[:, k:k + P0, :] for k in range(K1)],
                              axis=-1)                                   # (N, P0, K1*Cin)
    patches = jnp.pad(patches, ((0, 0), (0, 0), (0, kpad - K1 * Cin)))
    return patches.astype(jnp.bfloat16)


def forward(params, x_ncl):
    """x_ncl: (batch, in_channels, length) as PyTorch Conv1d expects."""
    N, Cin, L = x_ncl.shape
    meta = params["meta"]
    K1, cpad, kpad, ncpad = meta["filter_length"], meta["cpad"], meta["kpad"], meta["ncpad"]
    num_classes = meta["num_classes"]
    K2 = 3
    n_conv2 = len(params["convs"])
    n_dense = len(params["denses"])

    P0 = L - K1 + 1
    valid_final = P0 - n_conv2 * (K2 - 1)
    assert Cin == meta["in_channels"], "channel mismatch"
    assert P0 >= 1 and valid_final >= 1, "sequence too short for the conv stack"

    patches = _im2col_patches(x_ncl, K1, kpad)              # (N, P0, kpad) bf16

    args = [patches, params["conv1"][0], params["conv1"][1]]
    for w, b in params["convs"]:
        args += [w, b]
    for w, b in params["denses"]:
        args += [w, b]
    args += [params["pred"][0], params["pred"][1]]

    def const_spec(a):                   # weights: whole-array VMEM residents
        return pl.BlockSpec(a.shape, lambda n: (0,) * a.ndim)

    in_specs = ([pl.BlockSpec((1, P0, kpad), lambda n: (n, 0, 0))] +
                [const_spec(a) for a in args[1:]])
    out_specs = pl.BlockSpec((1, 1, ncpad), lambda n: (n, 0, 0))

    # Advisory cost estimate so XLA can overlap this tiny call with neighbors.
    flops = 2 * P0 * kpad * cpad
    P = P0
    for _ in range(n_conv2):
        Pn = P - K2 + 1
        flops += 2 * Pn * K2 * cpad * cpad
        P = Pn
    for w, _ in params["denses"]:
        flops += 2 * w.shape[0] * w.shape[1]
    flops += 2 * params["pred"][0].shape[0] * ncpad
    flops *= N
    bytes_accessed = int(sum(a.size * a.dtype.itemsize for a in args)) + N * ncpad * 4
    cost = pl.CostEstimate(flops=int(flops), transcendentals=int(N * ncpad),
                           bytes_accessed=bytes_accessed)

    kernel = _make_fused_kernel(P0, K2, n_conv2, n_dense)
    out = pl.pallas_call(
        kernel,
        out_shape=jax.ShapeDtypeStruct((N, 1, ncpad), jnp.float32),
        grid=(N,),
        in_specs=in_specs,
        out_specs=out_specs,
        compiler_params=pltpu.CompilerParams(
            dimension_semantics=("parallel",),
            vmem_limit_bytes=32 * 1024 * 1024),
        cost_estimate=cost,
    )(*args)
    return out[:, 0, :num_classes]


def forward_reference(params, x_ncl):
    """Pure-jnp reference mirroring the kernel's (bf16-matmul, f32-accum) math."""
    meta = params["meta"]
    K1, kpad = meta["filter_length"], meta["kpad"]
    num_classes = meta["num_classes"]
    K2 = 3

    patches = _im2col_patches(x_ncl, K1, kpad)                     # (N, P0, kpad) bf16
    w1, b1 = params["conv1"]
    h = jnp.einsum("npk,ko->npo", patches, w1,
                   preferred_element_type=jnp.float32)
    h = jnp.maximum(h + b1[None], 0.0)

    for w, b in params["convs"]:
        Pn = h.shape[1] - K2 + 1
        hb = h.astype(jnp.bfloat16)
        acc = sum(jnp.einsum("npc,co->npo", hb[:, k:k + Pn, :], w[k],
                             preferred_element_type=jnp.float32)
                  for k in range(K2))
        h = jnp.maximum(acc + b[None], 0.0)

    a = jnp.max(h, axis=1)                                         # (N, cpad)
    for w, b in params["denses"]:
        a = jnp.maximum(
            jnp.einsum("nc,co->no", a.astype(jnp.bfloat16), w,
                       preferred_element_type=jnp.float32) + b, 0.0)
    wp, bp = params["pred"]
    logits = jnp.einsum("nc,co->no", a.astype(jnp.bfloat16), wp,
                        preferred_element_type=jnp.float32) + bp
    z = jnp.clip(logits, -30.0, 30.0)
    return (1.0 / (1.0 + jnp.exp(-z)))[:, :num_classes]


# ----------------------------------- main ----------------------------------- #

if __name__ == "__main__":
    key = jax.random.PRNGKey(0)
    k_param, k_x = jax.random.split(key)

    params = init_params(k_param)
    # Input like PyTorch Conv1d: (batch, in_channels, length)
    x = jax.random.normal(k_x, (2, 4, 64), jnp.float32)

    out = jax.block_until_ready(forward(params, x))
    ref = jax.block_until_ready(forward_reference(params, x))

    assert out.shape == (2, 1), out.shape
    assert jnp.allclose(out, ref, atol=1e-4, rtol=1e-4), (out, ref)

    print("KERNEL_OK")
</pallas_src>

<mosaic_0001>
module attributes {stable_mosaic.version = 11 : i64} {
  func.func @kernel(%arg0: i32, %arg1: memref<1x40x128xbf16, #tpu.memory_space<vmem>>, %arg2: memref<128x128xbf16, #tpu.memory_space<vmem>>, %arg3: memref<1x128xf32, #tpu.memory_space<vmem>>, %arg4: memref<3x128x128xbf16, #tpu.memory_space<vmem>>, %arg5: memref<1x128xf32, #tpu.memory_space<vmem>>, %arg6: memref<3x128x128xbf16, #tpu.memory_space<vmem>>, %arg7: memref<1x128xf32, #tpu.memory_space<vmem>>, %arg8: memref<128x256xbf16, #tpu.memory_space<vmem>>, %arg9: memref<1x256xf32, #tpu.memory_space<vmem>>, %arg10: memref<256x256xbf16, #tpu.memory_space<vmem>>, %arg11: memref<1x256xf32, #tpu.memory_space<vmem>>, %arg12: memref<256x128xbf16, #tpu.memory_space<vmem>>, %arg13: memref<1x128xf32, #tpu.memory_space<vmem>>, %arg14: memref<1x1x128xf32, #tpu.memory_space<vmem>>) attributes {dimension_semantics = [#tpu.dimension_semantics<parallel>], iteration_bounds = array<i64: 2>, scalar_prefetch = 0 : i64, scratch_operands = 0 : i64, tpu.core_type = #tpu.core_type<tc>, window_params = [{transform_indices = @transform_0, window_bounds = array<i64: 1, 40, 128>}, {pipeline_mode = #tpu.pipeline_mode<synchronous>, transform_indices = @transform_1, window_bounds = array<i64: 128, 128>}, {pipeline_mode = #tpu.pipeline_mode<synchronous>, transform_indices = @transform_2, window_bounds = array<i64: 1, 128>}, {pipeline_mode = #tpu.pipeline_mode<synchronous>, transform_indices = @transform_3, window_bounds = array<i64: 3, 128, 128>}, {pipeline_mode = #tpu.pipeline_mode<synchronous>, transform_indices = @transform_4, window_bounds = array<i64: 1, 128>}, {pipeline_mode = #tpu.pipeline_mode<synchronous>, transform_indices = @transform_5, window_bounds = array<i64: 3, 128, 128>}, {pipeline_mode = #tpu.pipeline_mode<synchronous>, transform_indices = @transform_6, window_bounds = array<i64: 1, 128>}, {pipeline_mode = #tpu.pipeline_mode<synchronous>, transform_indices = @transform_7, window_bounds = array<i64: 128, 256>}, {pipeline_mode = #tpu.pipeline_mode<synchronous>, transform_indices = @transform_8, window_bounds = array<i64: 1, 256>}, {pipeline_mode = #tpu.pipeline_mode<synchronous>, transform_indices = @transform_9, window_bounds = array<i64: 256, 256>}, {pipeline_mode = #tpu.pipeline_mode<synchronous>, transform_indices = @transform_10, window_bounds = array<i64: 1, 256>}, {pipeline_mode = #tpu.pipeline_mode<synchronous>, transform_indices = @transform_11, window_bounds = array<i64: 256, 128>}, {pipeline_mode = #tpu.pipeline_mode<synchronous>, transform_indices = @transform_12, window_bounds = array<i64: 1, 128>}, {transform_indices = @transform_13, window_bounds = array<i64: 1, 1, 128>}]} {
    %c0 = arith.constant 0 : index
    %c0_0 = arith.constant 0 : index
    %c0_1 = arith.constant 0 : index
    %0 = vector.load %arg1[%c0, %c0_0, %c0_1] : memref<1x40x128xbf16, #tpu.memory_space<vmem>>, vector<1x40x128xbf16>
    %1 = vector.shape_cast %0 : vector<1x40x128xbf16> to vector<40x128xbf16>
    %c0_2 = arith.constant 0 : index
    %c0_3 = arith.constant 0 : index
    %2 = vector.load %arg2[%c0_2, %c0_3] : memref<128x128xbf16, #tpu.memory_space<vmem>>, vector<128x128xbf16>
    %cst = arith.constant dense<0.000000e+00> : vector<40x128xf32>
    %3 = tpu.matmul %1, %2, %cst {dimension_numbers = #tpu.dot_dimension_numbers<[1], [0], [0], [1], [0, 0, 1, 1], [], []>} : vector<40x128xbf16>, vector<128x128xbf16>, vector<40x128xf32> -> vector<40x128xf32>
    %c0_4 = arith.constant 0 : index
    %c0_5 = arith.constant 0 : index
    %4 = vector.load %arg3[%c0_4, %c0_5] : memref<1x128xf32, #tpu.memory_space<vmem>>, vector<1x128xf32>
    %5 = vector.broadcast %4 : vector<1x128xf32> to vector<40x128xf32>
    %6 = arith.addf %3, %5 : vector<40x128xf32>
    %cst_6 = arith.constant 0.000000e+00 : f32
    %7 = vector.broadcast %cst_6 : f32 to vector<40x128xf32>
    %8 = arith.maximumf %6, %7 : vector<40x128xf32>
    %9 = arith.truncf %8 : vector<40x128xf32> to vector<40x128xbf16>
    %10 = vector.extract_strided_slice %9 {offsets = [0, 0], sizes = [38, 128], strides = [1, 1]} : vector<40x128xbf16> to vector<38x128xbf16>
    %c0_7 = arith.constant 0 : index
    %c0_8 = arith.constant 0 : index
    %c0_9 = arith.constant 0 : index
    %11 = vector.load %arg4[%c0_7, %c0_8, %c0_9] : memref<3x128x128xbf16, #tpu.memory_space<vmem>>, vector<1x128x128xbf16>
    %12 = vector.shape_cast %11 : vector<1x128x128xbf16> to vector<128x128xbf16>
    %cst_10 = arith.constant dense<0.000000e+00> : vector<38x128xf32>
    %13 = tpu.matmul %10, %12, %cst_10 {dimension_numbers = #tpu.dot_dimension_numbers<[1], [0], [0], [1], [0, 0, 1, 1], [], []>} : vector<38x128xbf16>, vector<128x128xbf16>, vector<38x128xf32> -> vector<38x128xf32>
    %14 = vector.extract_strided_slice %9 {offsets = [1, 0], sizes = [38, 128], strides = [1, 1]} : vector<40x128xbf16> to vector<38x128xbf16>
    %c1 = arith.constant 1 : index
    %c0_11 = arith.constant 0 : index
    %c0_12 = arith.constant 0 : index
    %15 = vector.load %arg4[%c1, %c0_11, %c0_12] : memref<3x128x128xbf16, #tpu.memory_space<vmem>>, vector<1x128x128xbf16>
    %16 = vector.shape_cast %15 : vector<1x128x128xbf16> to vector<128x128xbf16>
    %cst_13 = arith.constant dense<0.000000e+00> : vector<38x128xf32>
    %17 = tpu.matmul %14, %16, %cst_13 {dimension_numbers = #tpu.dot_dimension_numbers<[1], [0], [0], [1], [0, 0, 1, 1], [], []>} : vector<38x128xbf16>, vector<128x128xbf16>, vector<38x128xf32> -> vector<38x128xf32>
    %18 = vector.extract_strided_slice %9 {offsets = [2, 0], sizes = [38, 128], strides = [1, 1]} : vector<40x128xbf16> to vector<38x128xbf16>
    %c2 = arith.constant 2 : index
    %c0_14 = arith.constant 0 : index
    %c0_15 = arith.constant 0 : index
    %19 = vector.load %arg4[%c2, %c0_14, %c0_15] : memref<3x128x128xbf16, #tpu.memory_space<vmem>>, vector<1x128x128xbf16>
    %20 = vector.shape_cast %19 : vector<1x128x128xbf16> to vector<128x128xbf16>
    %cst_16 = arith.constant dense<0.000000e+00> : vector<38x128xf32>
    %21 = tpu.matmul %18, %20, %cst_16 {dimension_numbers = #tpu.dot_dimension_numbers<[1], [0], [0], [1], [0, 0, 1, 1], [], []>} : vector<38x128xbf16>, vector<128x128xbf16>, vector<38x128xf32> -> vector<38x128xf32>
    %22 = arith.addf %13, %17 : vector<38x128xf32>
    %23 = arith.addf %22, %21 : vector<38x128xf32>
    %c0_17 = arith.constant 0 : index
    %c0_18 = arith.constant 0 : index
    %24 = vector.load %arg5[%c0_17, %c0_18] : memref<1x128xf32, #tpu.memory_space<vmem>>, vector<1x128xf32>
    %25 = vector.broadcast %24 : vector<1x128xf32> to vector<38x128xf32>
    %26 = arith.addf %23, %25 : vector<38x128xf32>
    %cst_19 = arith.constant 0.000000e+00 : f32
    %27 = vector.broadcast %cst_19 : f32 to vector<38x128xf32>
    %28 = arith.maximumf %26, %27 : vector<38x128xf32>
    %29 = arith.truncf %28 : vector<38x128xf32> to vector<38x128xbf16>
    %30 = vector.extract_strided_slice %29 {offsets = [0, 0], sizes = [36, 128], strides = [1, 1]} : vector<38x128xbf16> to vector<36x128xbf16>
    %c0_20 = arith.constant 0 : index
    %c0_21 = arith.constant 0 : index
    %c0_22 = arith.constant 0 : index
    %31 = vector.load %arg6[%c0_20, %c0_21, %c0_22] : memref<3x128x128xbf16, #tpu.memory_space<vmem>>, vector<1x128x128xbf16>
    %32 = vector.shape_cast %31 : vector<1x128x128xbf16> to vector<128x128xbf16>
    %cst_23 = arith.constant dense<0.000000e+00> : vector<36x128xf32>
    %33 = tpu.matmul %30, %32, %cst_23 {dimension_numbers = #tpu.dot_dimension_numbers<[1], [0], [0], [1], [0, 0, 1, 1], [], []>} : vector<36x128xbf16>, vector<128x128xbf16>, vector<36x128xf32> -> vector<36x128xf32>
    %34 = vector.extract_strided_slice %29 {offsets = [1, 0], sizes = [36, 128], strides = [1, 1]} : vector<38x128xbf16> to vector<36x128xbf16>
    %c1_24 = arith.constant 1 : index
    %c0_25 = arith.constant 0 : index
    %c0_26 = arith.constant 0 : index
    %35 = vector.load %arg6[%c1_24, %c0_25, %c0_26] : memref<3x128x128xbf16, #tpu.memory_space<vmem>>, vector<1x128x128xbf16>
    %36 = vector.shape_cast %35 : vector<1x128x128xbf16> to vector<128x128xbf16>
    %cst_27 = arith.constant dense<0.000000e+00> : vector<36x128xf32>
    %37 = tpu.matmul %34, %36, %cst_27 {dimension_numbers = #tpu.dot_dimension_numbers<[1], [0], [0], [1], [0, 0, 1, 1], [], []>} : vector<36x128xbf16>, vector<128x128xbf16>, vector<36x128xf32> -> vector<36x128xf32>
    %38 = vector.extract_strided_slice %29 {offsets = [2, 0], sizes = [36, 128], strides = [1, 1]} : vector<38x128xbf16> to vector<36x128xbf16>
    %c2_28 = arith.constant 2 : index
    %c0_29 = arith.constant 0 : index
    %c0_30 = arith.constant 0 : index
    %39 = vector.load %arg6[%c2_28, %c0_29, %c0_30] : memref<3x128x128xbf16, #tpu.memory_space<vmem>>, vector<1x128x128xbf16>
    %40 = vector.shape_cast %39 : vector<1x128x128xbf16> to vector<128x128xbf16>
    %cst_31 = arith.constant dense<0.000000e+00> : vector<36x128xf32>
    %41 = tpu.matmul %38, %40, %cst_31 {dimension_numbers = #tpu.dot_dimension_numbers<[1], [0], [0], [1], [0, 0, 1, 1], [], []>} : vector<36x128xbf16>, vector<128x128xbf16>, vector<36x128xf32> -> vector<36x128xf32>
    %42 = arith.addf %33, %37 : vector<36x128xf32>
    %43 = arith.addf %42, %41 : vector<36x128xf32>
    %c0_32 = arith.constant 0 : index
    %c0_33 = arith.constant 0 : index
    %44 = vector.load %arg7[%c0_32, %c0_33] : memref<1x128xf32, #tpu.memory_space<vmem>>, vector<1x128xf32>
    %45 = vector.broadcast %44 : vector<1x128xf32> to vector<36x128xf32>
    %46 = arith.addf %43, %45 : vector<36x128xf32>
    %cst_34 = arith.constant 0.000000e+00 : f32
    %47 = vector.broadcast %cst_34 : f32 to vector<36x128xf32>
    %48 = arith.maximumf %46, %47 : vector<36x128xf32>
    %cst_35 = arith.constant dense<0xFF800000> : vector<128xf32>
    %49 = vector.multi_reduction <maximumf>, %48, %cst_35 [0] : vector<36x128xf32> to vector<128xf32>
    %50 = vector.shape_cast %49 : vector<128xf32> to vector<1x128xf32>
    %51 = arith.truncf %50 : vector<1x128xf32> to vector<1x128xbf16>
    %c0_36 = arith.constant 0 : index
    %c0_37 = arith.constant 0 : index
    %52 = vector.load %arg8[%c0_36, %c0_37] : memref<128x256xbf16, #tpu.memory_space<vmem>>, vector<128x256xbf16>
    %cst_38 = arith.constant dense<0.000000e+00> : vector<1x256xf32>
    %53 = tpu.matmul %51, %52, %cst_38 {dimension_numbers = #tpu.dot_dimension_numbers<[1], [0], [0], [1], [0, 0, 1, 1], [], []>} : vector<1x128xbf16>, vector<128x256xbf16>, vector<1x256xf32> -> vector<1x256xf32>
    %c0_39 = arith.constant 0 : index
    %c0_40 = arith.constant 0 : index
    %54 = vector.load %arg9[%c0_39, %c0_40] : memref<1x256xf32, #tpu.memory_space<vmem>>, vector<1x256xf32>
    %55 = arith.addf %53, %54 : vector<1x256xf32>
    %cst_41 = arith.constant 0.000000e+00 : f32
    %56 = vector.broadcast %cst_41 : f32 to vector<1x256xf32>
    %57 = arith.maximumf %55, %56 : vector<1x256xf32>
    %58 = arith.truncf %57 : vector<1x256xf32> to vector<1x256xbf16>
    %c0_42 = arith.constant 0 : index
    %c0_43 = arith.constant 0 : index
    %59 = vector.load %arg10[%c0_42, %c0_43] : memref<256x256xbf16, #tpu.memory_space<vmem>>, vector<256x256xbf16>
    %cst_44 = arith.constant dense<0.000000e+00> : vector<1x256xf32>
    %60 = tpu.matmul %58, %59, %cst_44 {dimension_numbers = #tpu.dot_dimension_numbers<[1], [0], [0], [1], [0, 0, 1, 1], [], []>} : vector<1x256xbf16>, vector<256x256xbf16>, vector<1x256xf32> -> vector<1x256xf32>
    %c0_45 = arith.constant 0 : index
    %c0_46 = arith.constant 0 : index
    %61 = vector.load %arg11[%c0_45, %c0_46] : memref<1x256xf32, #tpu.memory_space<vmem>>, vector<1x256xf32>
    %62 = arith.addf %60, %61 : vector<1x256xf32>
    %cst_47 = arith.constant 0.000000e+00 : f32
    %63 = vector.broadcast %cst_47 : f32 to vector<1x256xf32>
    %64 = arith.maximumf %62, %63 : vector<1x256xf32>
    %65 = arith.truncf %64 : vector<1x256xf32> to vector<1x256xbf16>
    %c0_48 = arith.constant 0 : index
    %c0_49 = arith.constant 0 : index
    %66 = vector.load %arg12[%c0_48, %c0_49] : memref<256x128xbf16, #tpu.memory_space<vmem>>, vector<256x128xbf16>
    %cst_50 = arith.constant dense<0.000000e+00> : vector<1x128xf32>
    %67 = tpu.matmul %65, %66, %cst_50 {dimension_numbers = #tpu.dot_dimension_numbers<[1], [0], [0], [1], [0, 0, 1, 1], [], []>} : vector<1x256xbf16>, vector<256x128xbf16>, vector<1x128xf32> -> vector<1x128xf32>
    %c0_51 = arith.constant 0 : index
    %c0_52 = arith.constant 0 : index
    %68 = vector.load %arg13[%c0_51, %c0_52] : memref<1x128xf32, #tpu.memory_space<vmem>>, vector<1x128xf32>
    %69 = arith.addf %67, %68 : vector<1x128xf32>
    %cst_53 = arith.constant -3.000000e+01 : f32
    %cst_54 = arith.constant 3.000000e+01 : f32
    %70 = vector.broadcast %cst_53 : f32 to vector<1x128xf32>
    %71 = arith.maximumf %70, %69 : vector<1x128xf32>
    %72 = vector.broadcast %cst_54 : f32 to vector<1x128xf32>
    %73 = arith.minimumf %72, %71 : vector<1x128xf32>
    %cst_55 = arith.constant 0.000000e+00 : f32
    %74 = vector.broadcast %cst_55 : f32 to vector<1x128xf32>
    %75 = arith.subf %74, %73 : vector<1x128xf32>
    %76 = math.exp %75 : vector<1x128xf32>
    %cst_56 = arith.constant 1.000000e+00 : f32
    %77 = vector.broadcast %cst_56 : f32 to vector<1x128xf32>
    %78 = arith.addf %77, %76 : vector<1x128xf32>
    %cst_57 = arith.constant 1.000000e+00 : f32
    %79 = vector.broadcast %cst_57 : f32 to vector<1x128xf32>
    %80 = arith.divf %79, %78 : vector<1x128xf32>
    %c0_58 = arith.constant 0 : index
    %c0_59 = arith.constant 0 : index
    %c0_60 = arith.constant 0 : index
    %81 = vector.load %arg14[%c0_58, %c0_59, %c0_60] : memref<1x1x128xf32, #tpu.memory_space<vmem>>, vector<1x1x128xf32>
    %82 = vector.shape_cast %81 : vector<1x1x128xf32> to vector<1x128xf32>
    %83 = vector.shape_cast %80 : vector<1x128xf32> to vector<1x1x128xf32>
    tpu.vector_store %arg14[%c0_58, %c0_59, %c0_60], %83 {strides = array<i32>} : memref<1x1x128xf32, #tpu.memory_space<vmem>>, vector<1x1x128xf32>,
    return
  }
  func.func @transform_0(%arg0: i32) -> (i32, i32, i32) {
    %c0_i32 = arith.constant 0 : i32
    %c0_i32_0 = arith.constant 0 : i32
    %c0_i32_1 = arith.constant 0 : i32
    return %arg0, %c0_i32, %c0_i32_0 : i32, i32, i32
  }
  func.func @transform_1(%arg0: i32) -> (i32, i32) {
    %c0_i32 = arith.constant 0 : i32
    %c0_i32_0 = arith.constant 0 : i32
    %c0_i32_1 = arith.constant 0 : i32
    return %c0_i32, %c0_i32_0 : i32, i32
  }
  func.func @transform_2(%arg0: i32) -> (i32, i32) {
    %c0_i32 = arith.constant 0 : i32
    %c0_i32_0 = arith.constant 0 : i32
    %c0_i32_1 = arith.constant 0 : i32
    return %c0_i32, %c0_i32_0 : i32, i32
  }
  func.func @transform_3(%arg0: i32) -> (i32, i32, i32) {
    %c0_i32 = arith.constant 0 : i32
    %c0_i32_0 = arith.constant 0 : i32
    %c0_i32_1 = arith.constant 0 : i32
    %c0_i32_2 = arith.constant 0 : i32
    return %c0_i32, %c0_i32_0, %c0_i32_1 : i32, i32, i32
  }
  func.func @transform_4(%arg0: i32) -> (i32, i32) {
    %c0_i32 = arith.constant 0 : i32
    %c0_i32_0 = arith.constant 0 : i32
    %c0_i32_1 = arith.constant 0 : i32
    return %c0_i32, %c0_i32_0 : i32, i32
  }
  func.func @transform_5(%arg0: i32) -> (i32, i32, i32) {
    %c0_i32 = arith.constant 0 : i32
    %c0_i32_0 = arith.constant 0 : i32
    %c0_i32_1 = arith.constant 0 : i32
    %c0_i32_2 = arith.constant 0 : i32
    return %c0_i32, %c0_i32_0, %c0_i32_1 : i32, i32, i32
  }
  func.func @transform_6(%arg0: i32) -> (i32, i32) {
    %c0_i32 = arith.constant 0 : i32
    %c0_i32_0 = arith.constant 0 : i32
    %c0_i32_1 = arith.constant 0 : i32
    return %c0_i32, %c0_i32_0 : i32, i32
  }
  func.func @transform_7(%arg0: i32) -> (i32, i32) {
    %c0_i32 = arith.constant 0 : i32
    %c0_i32_0 = arith.constant 0 : i32
    %c0_i32_1 = arith.constant 0 : i32
    return %c0_i32, %c0_i32_0 : i32, i32
  }
  func.func @transform_8(%arg0: i32) -> (i32, i32) {
    %c0_i32 = arith.constant 0 : i32
    %c0_i32_0 = arith.constant 0 : i32
    %c0_i32_1 = arith.constant 0 : i32
    return %c0_i32, %c0_i32_0 : i32, i32
  }
  func.func @transform_9(%arg0: i32) -> (i32, i32) {
    %c0_i32 = arith.constant 0 : i32
    %c0_i32_0 = arith.constant 0 : i32
    %c0_i32_1 = arith.constant 0 : i32
    return %c0_i32, %c0_i32_0 : i32, i32
  }
  func.func @transform_10(%arg0: i32) -> (i32, i32) {
    %c0_i32 = arith.constant 0 : i32
    %c0_i32_0 = arith.constant 0 : i32
    %c0_i32_1 = arith.constant 0 : i32
    return %c0_i32, %c0_i32_0 : i32, i32
  }
  func.func @transform_11(%arg0: i32) -> (i32, i32) {
    %c0_i32 = arith.constant 0 : i32
    %c0_i32_0 = arith.constant 0 : i32
    %c0_i32_1 = arith.constant 0 : i32
    return %c0_i32, %c0_i32_0 : i32, i32
  }
  func.func @transform_12(%arg0: i32) -> (i32, i32) {
    %c0_i32 = arith.constant 0 : i32
    %c0_i32_0 = arith.constant 0 : i32
    %c0_i32_1 = arith.constant 0 : i32
    return %c0_i32, %c0_i32_0 : i32, i32
  }
  func.func @transform_13(%arg0: i32) -> (i32, i32, i32) {
    %c0_i32 = arith.constant 0 : i32
    %c0_i32_0 = arith.constant 0 : i32
    %c0_i32_1 = arith.constant 0 : i32
    return %arg0, %c0_i32, %c0_i32_0 : i32, i32, i32
  }
}

</mosaic_0001>

<llo_original>
// kernel: tpu_custom_call.1
$region0: #{tpu_custom_call.1}
  #allocation0 [shape = 'u32[]', space=smem, size = 0x4, offset = 0x4, fixed_abs, tag = 'smem constant byte address 0x4 - core index']
  #allocation1 [shape = 'u32[72,128]{1,0:T(1,128)}', space=vmem, size = 0x9000, scoped, tag = 'internal scratch']
  %s0 = inlined_call_operand.hbm [shape: bf16[2,40,128], index: 0, kind: input, shape index: {}]
  %s1 = inlined_call_operand.hbm [shape: bf16[128,128], index: 1, kind: input, shape index: {}]
  %s2 = inlined_call_operand.hbm [shape: f32[1,128], index: 2, kind: input, shape index: {}]
  %s3 = inlined_call_operand.hbm [shape: bf16[3,128,128], index: 3, kind: input, shape index: {}]
  %s4 = inlined_call_operand.hbm [shape: f32[1,128], index: 4, kind: input, shape index: {}]
  %s5 = inlined_call_operand.hbm [shape: bf16[3,128,128], index: 5, kind: input, shape index: {}]
  %s6 = inlined_call_operand.vmem [shape: f32[1,128], index: 6, kind: input, shape index: {}]
  %s7 = inlined_call_operand.hbm [shape: bf16[128,256], index: 7, kind: input, shape index: {}]
  %s8 = inlined_call_operand.vmem [shape: f32[1,256], index: 8, kind: input, shape index: {}]
  %s9 = inlined_call_operand.hbm [shape: bf16[256,256], index: 9, kind: input, shape index: {}]
  %s10 = inlined_call_operand.vmem [shape: f32[1,256], index: 10, kind: input, shape index: {}]
  %s11 = inlined_call_operand.hbm [shape: bf16[256,128], index: 11, kind: input, shape index: {}]
  %s12 = inlined_call_operand.vmem [shape: f32[1,128], index: 12, kind: input, shape index: {}]
  %s13 = inlined_call_operand.hbm [shape: f32[2,1,128], index: 13, kind: output, shape index: {}]
  %s14 = sld [smem:[#allocation0]]
  $region121: #{tpu_custom_call.1} parent=0
    _
  %s16 = ssub.s32 1, %s14
  %s17 = scalar_select 0, %s16, %s14
  $region1: #{tpu_custom_call.1} parent=0
    #allocation2 [shape = 'u8[20480]{0}', space=vmem, size = 0x5000, scoped, tag = 'input window, operand 0']
    #allocation3 [shape = 's32[2]{0}', space=sflag, size = 0x8, scoped, tag = 'scoped memory for tpu_custom_call.1']
    #allocation4 [shape = 's32[2]{0}', space=sflag, size = 0x8, scoped, tag = 'scoped memory for tpu_custom_call.1']
    #allocation5 [shape = 'u8[32768]{0}', space=vmem, size = 0x8000, scoped, tag = 'input window, operand 1, single buffered']
    #allocation6 [shape = 's32[1]{0}', space=sflag, size = 0x4, scoped, tag = 'scoped memory for tpu_custom_call.1']
    #allocation7 [shape = 'u8[512]{0}', space=vmem, size = 0x400, scoped, tag = 'input window, operand 2, single buffered']
    #allocation8 [shape = 'u8[98304]{0}', space=vmem, size = 0x18000, scoped, tag = 'input window, operand 3, single buffered']
    #allocation9 [shape = 's32[1]{0}', space=sflag, size = 0x4, scoped, tag = 'scoped memory for tpu_custom_call.1']
    #allocation10 [shape = 'u8[512]{0}', space=vmem, size = 0x400, scoped, tag = 'input window, operand 4, single buffered']
    #allocation11 [shape = 'u8[98304]{0}', space=vmem, size = 0x18000, scoped, tag = 'input window, operand 5, single buffered']
    #allocation12 [shape = 's32[1]{0}', space=sflag, size = 0x4, scoped, tag = 'scoped memory for tpu_custom_call.1']
    #allocation13 [shape = 'u8[65536]{0}', space=vmem, size = 0x10000, scoped, tag = 'input window, operand 7, single buffered']
    #allocation14 [shape = 'u8[131072]{0}', space=vmem, size = 0x20000, scoped, tag = 'input window, operand 9, single buffered']
    #allocation15 [shape = 's32[1]{0}', space=sflag, size = 0x4, scoped, tag = 'scoped memory for tpu_custom_call.1']
    #allocation16 [shape = 'u8[65536]{0}', space=vmem, size = 0x10000, scoped, tag = 'input window, operand 11, single buffered']
    #allocation17 [shape = 'u8[1024]{0}', space=vmem, size = 0x400, scoped, tag = 'output window, operand 0']
    %18 = vsyncpa [#allocation3], 0
    %s19 = scalar_lea.sflag [#allocation3], 1
    %20 = vsyncpa %s19, 0
    %21 = vsyncpa [#allocation6], 0
    %22 = vsyncpa [#allocation9], 0
    %23 = vsyncpa [#allocation12], 0
    %24 = vsyncpa [#allocation15], 0
    %25 = vsyncpa [#allocation4], 0
    %s26 = scalar_lea.sflag [#allocation4], 1
    %27 = vsyncpa %s26, 0
    loop: start=0, step=1, limit=4
    $region2: #{tpu_custom_call.1} parent=1 // loop_pre_header
      _
    $region3: #{tpu_custom_call.1} parent=1 // loop_header
      %s29 = sphi 0, %s33
      %p30 = scmp.ge.s32.totalorder %s29, 4
      %s39 = sphi 0, %s41
      %s42 = sphi 0, %s39
      %s43 = sphi 0, %s42
      %s59 = sphi 0, %s43
      %s63 = sphi 0, %s63
      %s65 = sphi 0, %s63
      %s66 = sphi 0, %s65
      %s80 = sphi 0, %s66
      %s84 = sphi 0, %s84
      %s86 = sphi 0, %s84
      %s87 = sphi 0, %s86
      %s101 = sphi 0, %s87
      %s105 = sphi 0, %s105
      %s107 = sphi 0, %s105
      %s108 = sphi 0, %s107
      %s122 = sphi 0, %s108
      %s126 = sphi 0, %s126
      %s128 = sphi 0, %s126
      %s129 = sphi 0, %s128
      %s143 = sphi 0, %s129
      %s147 = sphi 0, %s147
      %s149 = sphi 0, %s147
      %s150 = sphi 0, %s149
      %s164 = sphi 0, %s150
      %s168 = sphi 0, %s168
      %s170 = sphi 0, %s168
      %s171 = sphi 0, %s170
      %s185 = sphi 0, %s171
      %s189 = sphi 0, %s189
      %s191 = sphi 0, %s189
      %s192 = sphi 0, %s191
      %s206 = sphi 0, %s192
      %s210 = sphi 0, %s210
      %s212 = sphi 0, %s210
      %s213 = sphi 0, %s212
      %s227 = sphi 0, %s213
      %s231 = sphi 0, %s231
      %s233 = sphi 0, %s231
      %s234 = sphi 0, %s233
      %s248 = sphi 0, %s234
      %s252 = sphi 0, %s252
      %s254 = sphi 0, %s252
      %s255 = sphi 0, %s254
      %s269 = sphi 0, %s255
      %s273 = sphi 0, %s273
      %s275 = sphi 0, %s273
      %s276 = sphi 0, %s275
      %s290 = sphi 0, %s276
      %s294 = sphi 0, %s294
      %s296 = sphi 0, %s294
      %s297 = sphi 0, %s296
      %s311 = sphi 0, %s297
      %s317 = sphi 0, %s319
      %s320 = sphi 0, %s317
      %s321 = sphi 0, %s320
      %s337 = sphi 0, %s321
    $region4: #{tpu_custom_call.1} parent=1 // loop_header_branch
      %32 = sbr.rel (%p30) target = $region8
    $region5: #{tpu_custom_call.1} parent=1 // loop_body
      %s34 = ssub.s32 %s29, 1
      %s35 = ssub.s32 %s29, 2
      %s36 = sadd.s32 %s29, 1
      %s37 = ssub.s32 %s29, %s36
      %p38 = scmp.eq.s32.totalorder %s37, 0
      %s40 = sadd.s32 %s39, 1
      %s41 = scalar_select %p38, %s39, %s40
      %p44 = pneg %p38
      %p45 = scmp.eq.s32.totalorder %s29, 1
      %p46 = por %p44, %p45
      %p47 = scmp.ne.s32.totalorder %s39, %s42
      %p48 = scmp.eq.s32.totalorder %s29, 0
      %p49 = por %p47, %p48
      %p50 = scmp.ne.s32.totalorder %s39, %s42
      %p51 = scmp.eq.s32.totalorder %s34, 1
      %p52 = por %p50, %p51
      %p53 = scmp.ne.s32.totalorder %s42, %s43
      %p54 = scmp.eq.s32.totalorder %s34, 0
      %p55 = por %p53, %p54
      %p56 = scmp.ne.s32.totalorder %s42, %s43
      %p57 = scmp.eq.s32.totalorder %s35, 1
      %p58 = por %p56, %p57
      %p60 = scmp.ne.s32.totalorder %s43, %s59
      %p61 = scmp.eq.s32.totalorder %s35, 0
      %p62 = por %p60, %p61
      %s64 = sadd.s32 %s63, 1
      %p67 = scmp.eq.s32.totalorder %s29, 1
      %p68 = scmp.ne.s32.totalorder %s63, %s65
      %p69 = scmp.eq.s32.totalorder %s29, 0
      %p70 = por %p68, %p69
      %p71 = scmp.ne.s32.totalorder %s63, %s65
      %p72 = scmp.eq.s32.totalorder %s34, 1
      %p73 = por %p71, %p72
      %p74 = scmp.ne.s32.totalorder %s65, %s66
      %p75 = scmp.eq.s32.totalorder %s34, 0
      %p76 = por %p74, %p75
      %p77 = scmp.ne.s32.totalorder %s65, %s66
      %p78 = scmp.eq.s32.totalorder %s35, 1
      %p79 = por %p77, %p78
      %p81 = scmp.ne.s32.totalorder %s66, %s80
      %p82 = scmp.eq.s32.totalorder %s35, 0
      %p83 = por %p81, %p82
      %s85 = sadd.s32 %s84, 1
      %p88 = scmp.eq.s32.totalorder %s29, 1
      %p89 = scmp.ne.s32.totalorder %s84, %s86
      %p90 = scmp.eq.s32.totalorder %s29, 0
      %p91 = por %p89, %p90
      %p92 = scmp.ne.s32.totalorder %s84, %s86
      %p93 = scmp.eq.s32.totalorder %s34, 1
      %p94 = por %p92, %p93
      %p95 = scmp.ne.s32.totalorder %s86, %s87
      %p96 = scmp.eq.s32.totalorder %s34, 0
      %p97 = por %p95, %p96
      %p98 = scmp.ne.s32.totalorder %s86, %s87
      %p99 = scmp.eq.s32.totalorder %s35, 1
      %p100 = por %p98, %p99
      %p102 = scmp.ne.s32.totalorder %s87, %s101
      %p103 = scmp.eq.s32.totalorder %s35, 0
      %p104 = por %p102, %p103
      %s106 = sadd.s32 %s105, 1
      %p109 = scmp.eq.s32.totalorder %s29, 1
      %p110 = scmp.ne.s32.totalorder %s105, %s107
      %p111 = scmp.eq.s32.totalorder %s29, 0
      %p112 = por %p110, %p111
      %p113 = scmp.ne.s32.totalorder %s105, %s107
      %p114 = scmp.eq.s32.totalorder %s34, 1
      %p115 = por %p113, %p114
      %p116 = scmp.ne.s32.totalorder %s107, %s108
      %p117 = scmp.eq.s32.totalorder %s34, 0
      %p118 = por %p116, %p117
      %p119 = scmp.ne.s32.totalorder %s107, %s108
      %p120 = scmp.eq.s32.totalorder %s35, 1
      %p121 = por %p119, %p120
      %p123 = scmp.ne.s32.totalorder %s108, %s122
      %p124 = scmp.eq.s32.totalorder %s35, 0
      %p125 = por %p123, %p124
      %s127 = sadd.s32 %s126, 1
      %p130 = scmp.eq.s32.totalorder %s29, 1
      %p131 = scmp.ne.s32.totalorder %s126, %s128
      %p132 = scmp.eq.s32.totalorder %s29, 0
      %p133 = por %p131, %p132
      %p134 = scmp.ne.s32.totalorder %s126, %s128
      %p135 = scmp.eq.s32.totalorder %s34, 1
      %p136 = por %p134, %p135
      %p137 = scmp.ne.s32.totalorder %s128, %s129
      %p138 = scmp.eq.s32.totalorder %s34, 0
      %p139 = por %p137, %p138
      %p140 = scmp.ne.s32.totalorder %s128, %s129
      %p141 = scmp.eq.s32.totalorder %s35, 1
      %p142 = por %p140, %p141
      %p144 = scmp.ne.s32.totalorder %s129, %s143
      %p145 = scmp.eq.s32.totalorder %s35, 0
      %p146 = por %p144, %p145
      %s148 = sadd.s32 %s147, 1
      %p151 = scmp.eq.s32.totalorder %s29, 1
      %p152 = scmp.ne.s32.totalorder %s147, %s149
      %p153 = scmp.eq.s32.totalorder %s29, 0
      %p154 = por %p152, %p153
      %p155 = scmp.ne.s32.totalorder %s147, %s149
      %p156 = scmp.eq.s32.totalorder %s34, 1
      %p157 = por %p155, %p156
      %p158 = scmp.ne.s32.totalorder %s149, %s150
      %p159 = scmp.eq.s32.totalorder %s34, 0
      %p160 = por %p158, %p159
      %p161 = scmp.ne.s32.totalorder %s149, %s150
      %p162 = scmp.eq.s32.totalorder %s35, 1
      %p163 = por %p161, %p162
      %p165 = scmp.ne.s32.totalorder %s150, %s164
      %p166 = scmp.eq.s32.totalorder %s35, 0
      %p167 = por %p165, %p166
      %s169 = sadd.s32 %s168, 1
      %p172 = scmp.eq.s32.totalorder %s29, 1
      %p173 = scmp.ne.s32.totalorder %s168, %s170
      %p174 = scmp.eq.s32.totalorder %s29, 0
      %p175 = por %p173, %p174
      %p176 = scmp.ne.s32.totalorder %s168, %s170
      %p177 = scmp.eq.s32.totalorder %s34, 1
      %p178 = por %p176, %p177
      %p179 = scmp.ne.s32.totalorder %s170, %s171
      %p180 = scmp.eq.s32.totalorder %s34, 0
      %p181 = por %p179, %p180
      %p182 = scmp.ne.s32.totalorder %s170, %s171
      %p183 = scmp.eq.s32.totalorder %s35, 1
      %p184 = por %p182, %p183
      %p186 = scmp.ne.s32.totalorder %s171, %s185
      %p187 = scmp.eq.s32.totalorder %s35, 0
      %p188 = por %p186, %p187
      %s190 = sadd.s32 %s189, 1
      %p193 = scmp.eq.s32.totalorder %s29, 1
      %p194 = scmp.ne.s32.totalorder %s189, %s191
      %p195 = scmp.eq.s32.totalorder %s29, 0
      %p196 = por %p194, %p195
      %p197 = scmp.ne.s32.totalorder %s189, %s191
      %p198 = scmp.eq.s32.totalorder %s34, 1
      %p199 = por %p197, %p198
      %p200 = scmp.ne.s32.totalorder %s191, %s192
      %p201 = scmp.eq.s32.totalorder %s34, 0
      %p202 = por %p200, %p201
      %p203 = scmp.ne.s32.totalorder %s191, %s192
      %p204 = scmp.eq.s32.totalorder %s35, 1
      %p205 = por %p203, %p204
      %p207 = scmp.ne.s32.totalorder %s192, %s206
      %p208 = scmp.eq.s32.totalorder %s35, 0
      %p209 = por %p207, %p208
      %s211 = sadd.s32 %s210, 1
      %p214 = scmp.eq.s32.totalorder %s29, 1
      %p215 = scmp.ne.s32.totalorder %s210, %s212
      %p216 = scmp.eq.s32.totalorder %s29, 0
      %p217 = por %p215, %p216
      %p218 = scmp.ne.s32.totalorder %s210, %s212
      %p219 = scmp.eq.s32.totalorder %s34, 1
      %p220 = por %p218, %p219
      %p221 = scmp.ne.s32.totalorder %s212, %s213
      %p222 = scmp.eq.s32.totalorder %s34, 0
      %p223 = por %p221, %p222
      %p224 = scmp.ne.s32.totalorder %s212, %s213
      %p225 = scmp.eq.s32.totalorder %s35, 1
      %p226 = por %p224, %p225
      %p228 = scmp.ne.s32.totalorder %s213, %s227
      %p229 = scmp.eq.s32.totalorder %s35, 0
      %p230 = por %p228, %p229
      %s232 = sadd.s32 %s231, 1
      %p235 = scmp.eq.s32.totalorder %s29, 1
      %p236 = scmp.ne.s32.totalorder %s231, %s233
      %p237 = scmp.eq.s32.totalorder %s29, 0
      %p238 = por %p236, %p237
      %p239 = scmp.ne.s32.totalorder %s231, %s233
      %p240 = scmp.eq.s32.totalorder %s34, 1
      %p241 = por %p239, %p240
      %p242 = scmp.ne.s32.totalorder %s233, %s234
      %p243 = scmp.eq.s32.totalorder %s34, 0
      %p244 = por %p242, %p243
      %p245 = scmp.ne.s32.totalorder %s233, %s234
      %p246 = scmp.eq.s32.totalorder %s35, 1
      %p247 = por %p245, %p246
      %p249 = scmp.ne.s32.totalorder %s234, %s248
      %p250 = scmp.eq.s32.totalorder %s35, 0
      %p251 = por %p249, %p250
      %s253 = sadd.s32 %s252, 1
      %p256 = scmp.eq.s32.totalorder %s29, 1
      %p257 = scmp.ne.s32.totalorder %s252, %s254
      %p258 = scmp.eq.s32.totalorder %s29, 0
      %p259 = por %p257, %p258
      %p260 = scmp.ne.s32.totalorder %s252, %s254
      %p261 = scmp.eq.s32.totalorder %s34, 1
      %p262 = por %p260, %p261
      %p263 = scmp.ne.s32.totalorder %s254, %s255
      %p264 = scmp.eq.s32.totalorder %s34, 0
      %p265 = por %p263, %p264
      %p266 = scmp.ne.s32.totalorder %s254, %s255
      %p267 = scmp.eq.s32.totalorder %s35, 1
      %p268 = por %p266, %p267
      %p270 = scmp.ne.s32.totalorder %s255, %s269
      %p271 = scmp.eq.s32.totalorder %s35, 0
      %p272 = por %p270, %p271
      %s274 = sadd.s32 %s273, 1
      %p277 = scmp.eq.s32.totalorder %s29, 1
      %p278 = scmp.ne.s32.totalorder %s273, %s275
      %p279 = scmp.eq.s32.totalorder %s29, 0
      %p280 = por %p278, %p279
      %p281 = scmp.ne.s32.totalorder %s273, %s275
      %p282 = scmp.eq.s32.totalorder %s34, 1
      %p283 = por %p281, %p282
      %p284 = scmp.ne.s32.totalorder %s275, %s276
      %p285 = scmp.eq.s32.totalorder %s34, 0
      %p286 = por %p284, %p285
      %p287 = scmp.ne.s32.totalorder %s275, %s276
      %p288 = scmp.eq.s32.totalorder %s35, 1
      %p289 = por %p287, %p288
      %p291 = scmp.ne.s32.totalorder %s276, %s290
      %p292 = scmp.eq.s32.totalorder %s35, 0
      %p293 = por %p291, %p292
      %s295 = sadd.s32 %s294, 1
      %p298 = scmp.eq.s32.totalorder %s29, 1
      %p299 = scmp.ne.s32.totalorder %s294, %s296
      %p300 = scmp.eq.s32.totalorder %s29, 0
      %p301 = por %p299, %p300
      %p302 = scmp.ne.s32.totalorder %s294, %s296
      %p303 = scmp.eq.s32.totalorder %s34, 1
      %p304 = por %p302, %p303
      %p305 = scmp.ne.s32.totalorder %s296, %s297
      %p306 = scmp.eq.s32.totalorder %s34, 0
      %p307 = por %p305, %p306
      %p308 = scmp.ne.s32.totalorder %s296, %s297
      %p309 = scmp.eq.s32.totalorder %s35, 1
      %p310 = por %p308, %p309
      %p312 = scmp.ne.s32.totalorder %s297, %s311
      %p313 = scmp.eq.s32.totalorder %s35, 0
      %p314 = por %p312, %p313
      %s315 = ssub.s32 %s29, %s36
      %p316 = scmp.eq.s32.totalorder %s315, 0
      %s318 = sadd.s32 %s317, 1
      %s319 = scalar_select %p316, %s317, %s318
      %p322 = pneg %p316
      %p323 = scmp.eq.s32.totalorder %s29, 1
      %p324 = por %p322, %p323
      %p325 = scmp.ne.s32.totalorder %s317, %s320
      %p326 = scmp.eq.s32.totalorder %s29, 0
      %p327 = por %p325, %p326
      %p328 = scmp.ne.s32.totalorder %s317, %s320
      %p329 = scmp.eq.s32.totalorder %s34, 1
      %p330 = por %p328, %p329
      %p331 = scmp.ne.s32.totalorder %s320, %s321
      %p332 = scmp.eq.s32.totalorder %s34, 0
      %p333 = por %p331, %p332
      %p334 = scmp.ne.s32.totalorder %s320, %s321
      %p335 = scmp.eq.s32.totalorder %s35, 1
      %p336 = por %p334, %p335
      %p338 = scmp.ne.s32.totalorder %s321, %s337
      %p339 = scmp.eq.s32.totalorder %s35, 0
      %p340 = por %p338, %p339
      %p341 = scmp.le.s32.totalorder 1, %s29
      %p342 = scmp.lt.s32.totalorder %s29, 3
      %p343 = pnand %p341, %p342
      %p344 = pneg %p343
      // Predicated region
      $region9: #{tpu_custom_call.1} parent=5 // pred_check
        _
      $region10: #{tpu_custom_call.1} parent=5 // pred_check_branch
        %346 = sbr.rel (%p343) target = $region12
      $region11: #{tpu_custom_call.1} parent=5 // pred_region
        %s347 = ssub.s32 %s29, 1
        // Predicated region
        $region13: #{tpu_custom_call.1} parent=11 // pred_check
          %p348 = pneg %p76
        $region14: #{tpu_custom_call.1} parent=11 // pred_check_branch
          %350 = sbr.rel (%p348) target = $region16
        $region15: #{tpu_custom_call.1} parent=11 // pred_region
          %352 = vsyncadd [#allocation6], 0
          %s353 = sshll.u32 %s1, 4
          %s354 = int_to_ptr.hbm [resolvable:$true] %s353
          %s355 = sshll.u32 [#allocation5], 4
          %s356 = int_to_ptr.vmem [resolvable:$true] %s355
          %361 = dma.hbm_to_vmem [thread:$0]  %s354, 1024, %s356, [#allocation6], 64, 64, 4
        $region16: #{tpu_custom_call.1} parent=11 // pred_fallthru
          _
        // Predicated region
        $region17: #{tpu_custom_call.1} parent=11 // pred_check
          %p362 = pneg %p97
        $region18: #{tpu_custom_call.1} parent=11 // pred_check_branch
          %364 = sbr.rel (%p362) target = $region20
        $region19: #{tpu_custom_call.1} parent=11 // pred_region
          %366 = vsyncadd [#allocation6], 0
          %s368 = sshll.u32 %s2, 4
          %s369 = int_to_ptr.hbm [resolvable:$true] %s368
          %s370 = sshll.u32 [#allocation7], 4
          %s371 = int_to_ptr.vmem [resolvable:$true] %s370
          %373 = dma.hbm_to_vmem [thread:$0]  %s369, 16, %s371, [#allocation6]
        $region20: #{tpu_custom_call.1} parent=11 // pred_fallthru
          _
        // Predicated region
        $region21: #{tpu_custom_call.1} parent=11 // pred_check
          %p374 = pneg %p118
        $region22: #{tpu_custom_call.1} parent=11 // pred_check_branch
          %376 = sbr.rel (%p374) target = $region24
        $region23: #{tpu_custom_call.1} parent=11 // pred_region
          %378 = vsyncadd [#allocation9], 0
          %s379 = sshll.u32 %s3, 4
          %s380 = int_to_ptr.hbm [resolvable:$true] %s379
          %s381 = sshll.u32 [#allocation8], 4
          %s382 = int_to_ptr.vmem [resolvable:$true] %s381
          %387 = dma.hbm_to_vmem [thread:$0]  %s380, 3072, %s382, [#allocation9], 64, 64, 4
        $region24: #{tpu_custom_call.1} parent=11 // pred_fallthru
          _
        // Predicated region
        $region25: #{tpu_custom_call.1} parent=11 // pred_check
          %p388 = pneg %p139
        $region26: #{tpu_custom_call.1} parent=11 // pred_check_branch
          %390 = sbr.rel (%p388) target = $region28
        $region27: #{tpu_custom_call.1} parent=11 // pred_region
          %392 = vsyncadd [#allocation9], 0
          %s394 = sshll.u32 %s4, 4
          %s395 = int_to_ptr.hbm [resolvable:$true] %s394
          %s396 = sshll.u32 [#allocation10], 4
          %s397 = int_to_ptr.vmem [resolvable:$true] %s396
          %399 = dma.hbm_to_vmem [thread:$0]  %s395, 16, %s397, [#allocation9]
        $region28: #{tpu_custom_call.1} parent=11 // pred_fallthru
          _
        // Predicated region
        $region29: #{tpu_custom_call.1} parent=11 // pred_check
          %p400 = pneg %p160
        $region30: #{tpu_custom_call.1} parent=11 // pred_check_branch
          %402 = sbr.rel (%p400) target = $region32
        $region31: #{tpu_custom_call.1} parent=11 // pred_region
          %404 = vsyncadd [#allocation12], 0
          %s405 = sshll.u32 %s5, 4
          %s406 = int_to_ptr.hbm [resolvable:$true] %s405
          %s407 = sshll.u32 [#allocation11], 4
          %s408 = int_to_ptr.vmem [resolvable:$true] %s407
          %413 = dma.hbm_to_vmem [thread:$0]  %s406, 3072, %s408, [#allocation12], 64, 64, 4
        $region32: #{tpu_custom_call.1} parent=11 // pred_fallthru
          _
        // Predicated region
        $region33: #{tpu_custom_call.1} parent=11 // pred_check
          %p414 = pneg %p181
        $region34: #{tpu_custom_call.1} parent=11 // pred_check_branch
          %416 = sbr.rel (%p414) target = $region36
        $region35: #{tpu_custom_call.1} parent=11 // pred_region
          _
        $region36: #{tpu_custom_call.1} parent=11 // pred_fallthru
          _
        // Predicated region
        $region37: #{tpu_custom_call.1} parent=11 // pred_check
          %p417 = pneg %p202
        $region38: #{tpu_custom_call.1} parent=11 // pred_check_branch
          %419 = sbr.rel (%p417) target = $region40
        $region39: #{tpu_custom_call.1} parent=11 // pred_region
          %421 = vsyncadd [#allocation12], 0
          %s422 = sshll.u32 %s7, 4
          %s423 = int_to_ptr.hbm [resolvable:$true] %s422
          %s424 = sshll.u32 [#allocation13], 4
          %s425 = int_to_ptr.vmem [resolvable:$true] %s424
          %430 = dma.hbm_to_vmem [thread:$0]  %s423, 2048, %s425, [#allocation12], 128, 128, 8
        $region40: #{tpu_custom_call.1} parent=11 // pred_fallthru
          _
        // Predicated region
        $region41: #{tpu_custom_call.1} parent=11 // pred_check
          %p431 = pneg %p223
        $region42: #{tpu_custom_call.1} parent=11 // pred_check_branch
          %433 = sbr.rel (%p431) target = $region44
        $region43: #{tpu_custom_call.1} parent=11 // pred_region
          _
        $region44: #{tpu_custom_call.1} parent=11 // pred_fallthru
          _
        // Predicated region
        $region45: #{tpu_custom_call.1} parent=11 // pred_check
          %p434 = pneg %p244
        $region46: #{tpu_custom_call.1} parent=11 // pred_check_branch
          %436 = sbr.rel (%p434) target = $region48
        $region47: #{tpu_custom_call.1} parent=11 // pred_region
          %438 = vsyncadd [#allocation15], 0
          %s439 = sshll.u32 %s9, 4
          %s440 = int_to_ptr.hbm [resolvable:$true] %s439
          %s441 = sshll.u32 [#allocation14], 4
          %s442 = int_to_ptr.vmem [resolvable:$true] %s441
          %447 = dma.hbm_to_vmem [thread:$0]  %s440, 4096, %s442, [#allocation15], 128, 128, 8
        $region48: #{tpu_custom_call.1} parent=11 // pred_fallthru
          _
        // Predicated region
        $region49: #{tpu_custom_call.1} parent=11 // pred_check
          %p448 = pneg %p265
        $region50: #{tpu_custom_call.1} parent=11 // pred_check_branch
          %450 = sbr.rel (%p448) target = $region52
        $region51: #{tpu_custom_call.1} parent=11 // pred_region
          _
        $region52: #{tpu_custom_call.1} parent=11 // pred_fallthru
          _
        // Predicated region
        $region53: #{tpu_custom_call.1} parent=11 // pred_check
          %p451 = pneg %p286
        $region54: #{tpu_custom_call.1} parent=11 // pred_check_branch
          %453 = sbr.rel (%p451) target = $region56
        $region55: #{tpu_custom_call.1} parent=11 // pred_region
          %455 = vsyncadd [#allocation15], 0
          %s456 = sshll.u32 %s11, 4
          %s457 = int_to_ptr.hbm [resolvable:$true] %s456
          %s458 = sshll.u32 [#allocation16], 4
          %s459 = int_to_ptr.vmem [resolvable:$true] %s458
          %464 = dma.hbm_to_vmem [thread:$0]  %s457, 2048, %s459, [#allocation15], 64, 64, 4
        $region56: #{tpu_custom_call.1} parent=11 // pred_fallthru
          _
        // Predicated region
        $region57: #{tpu_custom_call.1} parent=11 // pred_check
          %p465 = pneg %p307
        $region58: #{tpu_custom_call.1} parent=11 // pred_check_branch
          %467 = sbr.rel (%p465) target = $region60
        $region59: #{tpu_custom_call.1} parent=11 // pred_region
          _
        $region60: #{tpu_custom_call.1} parent=11 // pred_fallthru
          _
      $region12: #{tpu_custom_call.1} parent=5 // pred_fallthru
        _
      %p468 = scmp.lt.s32.totalorder %s29, 2
      // Predicated region
      $region61: #{tpu_custom_call.1} parent=5 // pred_check
        %p469 = pneg %p468
      $region62: #{tpu_custom_call.1} parent=5 // pred_check_branch
        %471 = sbr.rel (%p469) target = $region64
      $region63: #{tpu_custom_call.1} parent=5 // pred_region
        // Predicated region
        $region65: #{tpu_custom_call.1} parent=63 // pred_check
          %p472 = pneg %p49
        $region66: #{tpu_custom_call.1} parent=63 // pred_check_branch
          %474 = sbr.rel (%p472) target = $region68
        $region67: #{tpu_custom_call.1} parent=63 // pred_region
          %s475 = sand.u32 %s39, 1
          %s476 = scalar_lea.sflag [#allocation3], %s475
          %s477 = sand.u32 %s39, 1
          %s478 = smul.addr %s477, 20
          %s479 = scalar_lea.vmem [#allocation2], %s478
          %481 = vsyncadd %s476, 0
          %s482 = smul.addr %s29, 5
          %s483 = smul.addr %s482, 4
          %s484 = scalar_lea.hbm %s0, %s483
          %s485 = sshll.u32 %s484, 4
          %s486 = int_to_ptr.hbm [resolvable:$true] %s485
          %s487 = sshll.u32 %s479, 4
          %s488 = int_to_ptr.vmem [resolvable:$true] %s487
          %493 = dma.hbm_to_vmem [thread:$0]  %s486, 320, %s488, %s476, 64, 64, 4
        $region68: #{tpu_custom_call.1} parent=63 // pred_fallthru
          _
      $region64: #{tpu_custom_call.1} parent=5 // pred_fallthru
        _
      %p494 = scmp.le.s32.totalorder 1, %s29
      %p495 = scmp.lt.s32.totalorder %s29, 3
      %p496 = pnand %p494, %p495
      %p497 = pneg %p496
      // Predicated region
      $region69: #{tpu_custom_call.1} parent=5 // pred_check
        _
      $region70: #{tpu_custom_call.1} parent=5 // pred_check_branch
        %499 = sbr.rel (%p496) target = $region72
      $region71: #{tpu_custom_call.1} parent=5 // pred_region
        %s500 = ssub.s32 %s29, 1
        %s501 = sand.u32 %s42, 1
        %s502 = scalar_lea.sflag [#allocation3], %s501
        %s503 = sand.u32 %s42, 1
        %s504 = smul.addr %s503, 20
        %s505 = scalar_lea.vmem [#allocation2], %s504
        // Predicated region
        $region73: #{tpu_custom_call.1} parent=71 // pred_check
          %p506 = pneg %p55
        $region74: #{tpu_custom_call.1} parent=71 // pred_check_branch
          %508 = sbr.rel (%p506) target = $region76
        $region75: #{tpu_custom_call.1} parent=71 // pred_region
          %510 = dma.done %s502, 320
        $region76: #{tpu_custom_call.1} parent=71 // pred_fallthru
          _
        // Predicated region
        $region77: #{tpu_custom_call.1} parent=71 // pred_check
          %p511 = pneg %p76
        $region78: #{tpu_custom_call.1} parent=71 // pred_check_branch
          %513 = sbr.rel (%p511) target = $region80
        $region79: #{tpu_custom_call.1} parent=71 // pred_region
          %515 = dma.done [#allocation6], 1024
        $region80: #{tpu_custom_call.1} parent=71 // pred_fallthru
          _
        // Predicated region
        $region81: #{tpu_custom_call.1} parent=71 // pred_check
          %p516 = pneg %p97
        $region82: #{tpu_custom_call.1} parent=71 // pred_check_branch
          %518 = sbr.rel (%p516) target = $region84
        $region83: #{tpu_custom_call.1} parent=71 // pred_region
          %520 = dma.done [#allocation6], 16
        $region84: #{tpu_custom_call.1} parent=71 // pred_fallthru
          _
        // Predicated region
        $region85: #{tpu_custom_call.1} parent=71 // pred_check
          %p521 = pneg %p118
        $region86: #{tpu_custom_call.1} parent=71 // pred_check_branch
          %523 = sbr.rel (%p521) target = $region88
        $region87: #{tpu_custom_call.1} parent=71 // pred_region
          %525 = dma.done [#allocation9], 3072
        $region88: #{tpu_custom_call.1} parent=71 // pred_fallthru
          _
        // Predicated region
        $region89: #{tpu_custom_call.1} parent=71 // pred_check
          %p526 = pneg %p139
        $region90: #{tpu_custom_call.1} parent=71 // pred_check_branch
          %528 = sbr.rel (%p526) target = $region92
        $region91: #{tpu_custom_call.1} parent=71 // pred_region
          %530 = dma.done [#allocation9], 16
        $region92: #{tpu_custom_call.1} parent=71 // pred_fallthru
          _
        // Predicated region
        $region93: #{tpu_custom_call.1} parent=71 // pred_check
          %p531 = pneg %p160
        $region94: #{tpu_custom_call.1} parent=71 // pred_check_branch
          %533 = sbr.rel (%p531) target = $region96
        $region95: #{tpu_custom_call.1} parent=71 // pred_region
          %535 = dma.done [#allocation12], 3072
        $region96: #{tpu_custom_call.1} parent=71 // pred_fallthru
          _
        // Predicated region
        $region97: #{tpu_custom_call.1} parent=71 // pred_check
          %p536 = pneg %p202
        $region98: #{tpu_custom_call.1} parent=71 // pred_check_branch
          %538 = sbr.rel (%p536) target = $region100
        $region99: #{tpu_custom_call.1} parent=71 // pred_region
          %540 = dma.done [#allocation12], 2048
        $region100: #{tpu_custom_call.1} parent=71 // pred_fallthru
          _
        // Predicated region
        $region101: #{tpu_custom_call.1} parent=71 // pred_check
          %p541 = pneg %p244
        $region102: #{tpu_custom_call.1} parent=71 // pred_check_branch
          %543 = sbr.rel (%p541) target = $region104
        $region103: #{tpu_custom_call.1} parent=71 // pred_region
          %545 = dma.done [#allocation15], 4096
        $region104: #{tpu_custom_call.1} parent=71 // pred_fallthru
          _
        // Predicated region
        $region105: #{tpu_custom_call.1} parent=71 // pred_check
          %p546 = pneg %p286
        $region106: #{tpu_custom_call.1} parent=71 // pred_check_branch
          %548 = sbr.rel (%p546) target = $region108
        $region107: #{tpu_custom_call.1} parent=71 // pred_region
          %550 = dma.done [#allocation15], 2048
        $region108: #{tpu_custom_call.1} parent=71 // pred_fallthru
          _
        %s551 = sand.u32 %s42, 1
        %s552 = scalar_lea.sflag [#allocation3], %s551
        %s553 = sand.u32 %s42, 1
        %s554 = smul.addr %s553, 20
        %s555 = scalar_lea.vmem [#allocation2], %s554
        %p556 = pneg %p55
        %p557 = pneg %p52
        %p558 = pneg %p76
        %p559 = pneg %p73
        %p560 = pneg %p97
        %p561 = pneg %p94
        %p562 = pneg %p118
        %p563 = pneg %p115
        %p564 = pneg %p139
        %p565 = pneg %p136
        %p566 = pneg %p160
        %p567 = pneg %p157
        %p568 = pneg %p181
        %p569 = pneg %p178
        %p570 = pneg %p202
        %p571 = pneg %p199
        %p572 = pneg %p223
        %p573 = pneg %p220
        %p574 = pneg %p244
        %p575 = pneg %p241
        %p576 = pneg %p265
        %p577 = pneg %p262
        %p578 = pneg %p286
        %p579 = pneg %p283
        %p580 = pneg %p307
        %p581 = pneg %p304
        %p582 = pneg %p333
        %p583 = pneg %p330
        %s584 = sand.u32 %s320, 1
        %s585 = scalar_lea.sflag [#allocation4], %s584
        %s586 = sand.u32 %s320, 1
        %s587 = scalar_lea.vmem [#allocation17], %s586
        %v588 = vld [vmem:[%s505] sm:$0xf]
        %v589 = vld [vmem:[%s505 + $0x4] sm:$0xf]
        %v590 = vld [vmem:[%s505 + $0x8] sm:$0xf]
        %v591 = vld [vmem:[%s505 + $0xc] sm:$0xf]
        %v592 = vld [vmem:[%s505 + $0x10] sm:$0xf]
        %v593 = vld [vmem:[#allocation5] sm:$0xf]
        %v594 = vld [vmem:[#allocation5 + $0x4] sm:$0xf]
        %v595 = vld [vmem:[#allocation5 + $0x8] sm:$0xf]
        %v596 = vld [vmem:[#allocation5 + $0xc] sm:$0xf]
        %v597 = vld [vmem:[#allocation5 + $0x10] sm:$0xf]
        %v598 = vld [vmem:[#allocation5 + $0x14] sm:$0xf]
        %v599 = vld [vmem:[#allocation5 + $0x18] sm:$0xf]
        %v600 = vld [vmem:[#allocation5 + $0x1c] sm:$0xf]
        %v601 = vld [vmem:[#allocation5 + $0x20] sm:$0xf]
        %v602 = vld [vmem:[#allocation5 + $0x24] sm:$0xf]
        %v603 = vld [vmem:[#allocation5 + $0x28] sm:$0xf]
        %v604 = vld [vmem:[#allocation5 + $0x2c] sm:$0xf]
        %v605 = vld [vmem:[#allocation5 + $0x30] sm:$0xf]
        %v606 = vld [vmem:[#allocation5 + $0x34] sm:$0xf]
        %v607 = vld [vmem:[#allocation5 + $0x38] sm:$0xf]
        %v608 = vld [vmem:[#allocation5 + $0x3c] sm:$0xf]
        %v609 = vld [vmem:[#allocation7] sm:$0x1]
        %v611 = vperm.slane %v609, 0
        %v618 = vunpack.c.l.b16 %v588
        %v619 = vunpack.c.l.b16 %v589
        %v620 = vunpack.c.l.b16 %v590
        %v621 = vunpack.c.l.b16 %v591
        %v622 = vunpack.c.l.b16 %v592
        %v623 = vpack.c.b16 %v619, %v618
        %v624 = vpack.c.b16 %v621, %v620
        %v625 = vpack.c.b16 %v622, %v622
        %v645 = vunpack.c.l.b16 %v593
        %v646 = vunpack.c.l.b16 %v594
        %v647 = vunpack.c.l.b16 %v595
        %v648 = vunpack.c.l.b16 %v596
        %v649 = vunpack.c.l.b16 %v597
        %v650 = vunpack.c.l.b16 %v598
        %v651 = vunpack.c.l.b16 %v599
        %v652 = vunpack.c.l.b16 %v600
        %v653 = vunpack.c.l.b16 %v601
        %v654 = vunpack.c.l.b16 %v602
        %v655 = vunpack.c.l.b16 %v603
        %v656 = vunpack.c.l.b16 %v604
        %v657 = vunpack.c.l.b16 %v605
        %v658 = vunpack.c.l.b16 %v606
        %v659 = vunpack.c.l.b16 %v607
        %v660 = vunpack.c.l.b16 %v608
        %v661 = vpack.c.b16 %v646, %v645
        %v662 = vpack.c.b16 %v648, %v647
        %v663 = vpack.c.b16 %v650, %v649
        %v664 = vpack.c.b16 %v652, %v651
        %v665 = vpack.c.b16 %v654, %v653
        %v666 = vpack.c.b16 %v656, %v655
        %v667 = vpack.c.b16 %v658, %v657
        %v668 = vpack.c.b16 %v660, %v659
        %677 = vmatpush.bf16.msra.mxu0 %v668
        %678 = vmatpush.bf16.msra.mxu0 %v667
        %679 = vmatpush.bf16.msra.mxu0 %v666
        %680 = vmatpush.bf16.msra.mxu0 %v665
        %681 = vmatpush.bf16.msra.mxu0 %v664
        %682 = vmatpush.bf16.msra.mxu0 %v663
        %683 = vmatpush.bf16.msra.mxu0 %v662
        %684 = vmatpush.bf16.msra.mxu0 %v661
        %685 = vmatmul.bf16.gmra.mxu0 %v623
        %v686 = vpop.f32.mrf.mxu0
        %v687 = vadd.f32 %v611, %v686
        %v688 = vpop.f32.mrf.mxu0
        %v689 = vadd.f32 %v611, %v688
        %690 = vmatmul.bf16.gmra.mxu0 %v624
        %v691 = vpop.f32.mrf.mxu0
        %v692 = vadd.f32 %v611, %v691
        %v693 = vpop.f32.mrf.mxu0
        %v694 = vadd.f32 %v611, %v693
        %695 = vmatmul.bf16.gmra.mxu0 %v625
        %v696 = vpop.f32.mrf.mxu0
        %v697 = vadd.f32 %v611, %v696
        %v698 = vpop.f32.mrf.mxu0
        %699 = vdwg.mxu0
        %v700 = vmax.f32 %v687, 0.0
        %v701 = vmax.f32 %v689, 0.0
        %v702 = vmax.f32 %v692, 0.0
        %v703 = vmax.f32 %v694, 0.0
        %v704 = vmax.f32 %v697, 0.0
        %v705 = vpack.c.bf16 %v700, %v700
        %v706 = vpack.c.bf16 %v701, %v701
        %v707 = vpack.c.bf16 %v702, %v702
        %v708 = vpack.c.bf16 %v703, %v703
        %v709 = vpack.c.bf16 %v704, %v704
        %v710 = vld [vmem:[#allocation8] sm:$0xf]
        %v711 = vld [vmem:[#allocation8 + $0x4] sm:$0xf]
        %v712 = vld [vmem:[#allocation8 + $0x8] sm:$0xf]
        %v713 = vld [vmem:[#allocation8 + $0xc] sm:$0xf]
        %v714 = vld [vmem:[#allocation8 + $0x10] sm:$0xf]
        %v715 = vld [vmem:[#allocation8 + $0x14] sm:$0xf]
        %v716 = vld [vmem:[#allocation8 + $0x18] sm:$0xf]
        %v717 = vld [vmem:[#allocation8 + $0x1c] sm:$0xf]
        %v718 = vld [vmem:[#allocation8 + $0x20] sm:$0xf]
        %v719 = vld [vmem:[#allocation8 + $0x24] sm:$0xf]
        %v720 = vld [vmem:[#allocation8 + $0x28] sm:$0xf]
        %v721 = vld [vmem:[#allocation8 + $0x2c] sm:$0xf]
        %v722 = vld [vmem:[#allocation8 + $0x30] sm:$0xf]
        %v723 = vld [vmem:[#allocation8 + $0x34] sm:$0xf]
        %v724 = vld [vmem:[#allocation8 + $0x38] sm:$0xf]
        %v725 = vld [vmem:[#allocation8 + $0x3c] sm:$0xf]
        %s726 = scalar_lea.vmem [#allocation8], 64
        %v727 = vld [vmem:[%s726] sm:$0xf]
        %v728 = vld [vmem:[%s726 + $0x4] sm:$0xf]
        %v729 = vld [vmem:[%s726 + $0x8] sm:$0xf]
        %v730 = vld [vmem:[%s726 + $0xc] sm:$0xf]
        %v731 = vld [vmem:[%s726 + $0x10] sm:$0xf]
        %v732 = vld [vmem:[%s726 + $0x14] sm:$0xf]
        %v733 = vld [vmem:[%s726 + $0x18] sm:$0xf]
        %v734 = vld [vmem:[%s726 + $0x1c] sm:$0xf]
        %v735 = vld [vmem:[%s726 + $0x20] sm:$0xf]
        %v736 = vld [vmem:[%s726 + $0x24] sm:$0xf]
        %v737 = vld [vmem:[%s726 + $0x28] sm:$0xf]
        %v738 = vld [vmem:[%s726 + $0x2c] sm:$0xf]
        %v739 = vld [vmem:[%s726 + $0x30] sm:$0xf]
        %v740 = vld [vmem:[%s726 + $0x34] sm:$0xf]
        %v741 = vld [vmem:[%s726 + $0x38] sm:$0xf]
        %v742 = vld [vmem:[%s726 + $0x3c] sm:$0xf]
        %v748 = vunpack.c.l.b16 %v705
        %v749 = vunpack.c.l.b16 %v706
        %v750 = vunpack.c.l.b16 %v707
        %v751 = vunpack.c.l.b16 %v708
        %v752 = vunpack.c.l.b16 %v709
        %v753 = vpack.c.b16 %v749, %v748
        %v754 = vpack.c.b16 %v751, %v750
        %v755 = vpack.c.b16 %v752, %v752
        %vm756 = vsmask.f32 7424
        %v758 = vshrl.u32 %v753, 16
        %v760 = vshll.u32 %v753, 16
        %v762 = vrot.slane %v760, 1
        %v763 = vor.u32 %v758, %v762
        %v765 = vshll.u32 %v754, 16
        %v767 = vrot.slane %v765, 1
        %v768 = vsel %vm756, %v763, %v767
        %v769 = vshrl.u32 %v754, 16
        %v771 = vor.u32 %v769, %v767
        %v773 = vshll.u32 %v755, 16
        %v775 = vrot.slane %v773, 1
        %v776 = vsel %vm756, %v771, %v775
        %v777 = vshrl.u32 %v755, 16
        %v779 = vor.u32 %v777, %v775
        %v799 = vunpack.c.l.b16 %v727
        %v800 = vunpack.c.l.b16 %v728
        %v801 = vunpack.c.l.b16 %v729
        %v802 = vunpack.c.l.b16 %v730
        %v803 = vunpack.c.l.b16 %v731
        %v804 = vunpack.c.l.b16 %v732
        %v805 = vunpack.c.l.b16 %v733
        %v806 = vunpack.c.l.b16 %v734
        %v807 = vunpack.c.l.b16 %v735
        %v808 = vunpack.c.l.b16 %v736
        %v809 = vunpack.c.l.b16 %v737
        %v810 = vunpack.c.l.b16 %v738
        %v811 = vunpack.c.l.b16 %v739
        %v812 = vunpack.c.l.b16 %v740
        %v813 = vunpack.c.l.b16 %v741
        %v814 = vunpack.c.l.b16 %v742
        %v815 = vpack.c.b16 %v800, %v799
        %v816 = vpack.c.b16 %v802, %v801
        %v817 = vpack.c.b16 %v804, %v803
        %v818 = vpack.c.b16 %v806, %v805
        %v819 = vpack.c.b16 %v808, %v807
        %v820 = vpack.c.b16 %v810, %v809
        %v821 = vpack.c.b16 %v812, %v811
        %v822 = vpack.c.b16 %v814, %v813
        %831 = vmatpush.bf16.msra.mxu0 %v822
        %832 = vmatpush.bf16.msra.mxu0 %v821
        %833 = vmatpush.bf16.msra.mxu0 %v820
        %834 = vmatpush.bf16.msra.mxu0 %v819
        %835 = vmatpush.bf16.msra.mxu0 %v818
        %836 = vmatpush.bf16.msra.mxu0 %v817
        %837 = vmatpush.bf16.msra.mxu0 %v816
        %838 = vmatpush.bf16.msra.mxu0 %v815
        %839 = vmatmul.bf16.gmra.mxu0 %v768
        %v840 = vpop.f32.mrf.mxu0
        %v841 = vadd.f32 0.0, %v840
        %v842 = vpop.f32.mrf.mxu0
        %v843 = vadd.f32 0.0, %v842
        %844 = vmatmul.bf16.gmra.mxu0 %v776
        %v845 = vpop.f32.mrf.mxu0
        %v846 = vadd.f32 0.0, %v845
        %v847 = vpop.f32.mrf.mxu0
        %v848 = vadd.f32 0.0, %v847
        %849 = vmatmul.bf16.gmra.mxu0 %v779
        %v850 = vpop.f32.mrf.mxu0
        %v851 = vadd.f32 0.0, %v850
        %v852 = vpop.f32.mrf.mxu0
        %853 = vdwg.mxu0
        %s854 = scalar_lea.vmem [#allocation8], 128
        %v855 = vld [vmem:[%s854] sm:$0xf]
        %v856 = vld [vmem:[%s854 + $0x4] sm:$0xf]
        %v857 = vld [vmem:[%s854 + $0x8] sm:$0xf]
        %v858 = vld [vmem:[%s854 + $0xc] sm:$0xf]
        %v859 = vld [vmem:[%s854 + $0x10] sm:$0xf]
        %v860 = vld [vmem:[%s854 + $0x14] sm:$0xf]
        %v861 = vld [vmem:[%s854 + $0x18] sm:$0xf]
        %v862 = vld [vmem:[%s854 + $0x1c] sm:$0xf]
        %v863 = vld [vmem:[%s854 + $0x20] sm:$0xf]
        %v864 = vld [vmem:[%s854 + $0x24] sm:$0xf]
        %v865 = vld [vmem:[%s854 + $0x28] sm:$0xf]
        %v866 = vld [vmem:[%s854 + $0x2c] sm:$0xf]
        %v867 = vld [vmem:[%s854 + $0x30] sm:$0xf]
        %v868 = vld [vmem:[%s854 + $0x34] sm:$0xf]
        %v869 = vld [vmem:[%s854 + $0x38] sm:$0xf]
        %v870 = vld [vmem:[%s854 + $0x3c] sm:$0xf]
        %vm871 = vcmask 1046528
        %v872 = vrot.slane %v753, 1
        %v873 = vrot.slane %v754, 1
        %v874 = vsel %vm871, %v872, %v873
        %v875 = vrot.slane %v755, 1
        %v876 = vsel %vm871, %v873, %v875
        %v896 = vunpack.c.l.b16 %v855
        %v897 = vunpack.c.l.b16 %v856
        %v898 = vunpack.c.l.b16 %v857
        %v899 = vunpack.c.l.b16 %v858
        %v900 = vunpack.c.l.b16 %v859
        %v901 = vunpack.c.l.b16 %v860
        %v902 = vunpack.c.l.b16 %v861
        %v903 = vunpack.c.l.b16 %v862
        %v904 = vunpack.c.l.b16 %v863
        %v905 = vunpack.c.l.b16 %v864
        %v906 = vunpack.c.l.b16 %v865
        %v907 = vunpack.c.l.b16 %v866
        %v908 = vunpack.c.l.b16 %v867
        %v909 = vunpack.c.l.b16 %v868
        %v910 = vunpack.c.l.b16 %v869
        %v911 = vunpack.c.l.b16 %v870
        %v912 = vpack.c.b16 %v897, %v896
        %v913 = vpack.c.b16 %v899, %v898
        %v914 = vpack.c.b16 %v901, %v900
        %v915 = vpack.c.b16 %v903, %v902
        %v916 = vpack.c.b16 %v905, %v904
        %v917 = vpack.c.b16 %v907, %v906
        %v918 = vpack.c.b16 %v909, %v908
        %v919 = vpack.c.b16 %v911, %v910
        %928 = vmatpush.bf16.msra.mxu0 %v919
        %929 = vmatpush.bf16.msra.mxu0 %v918
        %930 = vmatpush.bf16.msra.mxu0 %v917
        %931 = vmatpush.bf16.msra.mxu0 %v916
        %932 = vmatpush.bf16.msra.mxu0 %v915
        %933 = vmatpush.bf16.msra.mxu0 %v914
        %934 = vmatpush.bf16.msra.mxu0 %v913
        %935 = vmatpush.bf16.msra.mxu0 %v912
        %936 = vmatmul.bf16.gmra.mxu0 %v874
        %v937 = vpop.f32.mrf.mxu0
        %v938 = vadd.f32 0.0, %v937
        %v939 = vpop.f32.mrf.mxu0
        %v940 = vadd.f32 0.0, %v939
        %941 = vmatmul.bf16.gmra.mxu0 %v876
        %v942 = vpop.f32.mrf.mxu0
        %v943 = vadd.f32 0.0, %v942
        %v944 = vpop.f32.mrf.mxu0
        %v945 = vadd.f32 0.0, %v944
        %946 = vmatmul.bf16.gmra.mxu0 %v875
        %v947 = vpop.f32.mrf.mxu0
        %v948 = vadd.f32 0.0, %v947
        %v949 = vpop.f32.mrf.mxu0
        %950 = vdwg.mxu0
        %v970 = vunpack.c.l.b16 %v710
        %v971 = vunpack.c.l.b16 %v711
        %v972 = vunpack.c.l.b16 %v712
        %v973 = vunpack.c.l.b16 %v713
        %v974 = vunpack.c.l.b16 %v714
        %v975 = vunpack.c.l.b16 %v715
        %v976 = vunpack.c.l.b16 %v716
        %v977 = vunpack.c.l.b16 %v717
        %v978 = vunpack.c.l.b16 %v718
        %v979 = vunpack.c.l.b16 %v719
        %v980 = vunpack.c.l.b16 %v720
        %v981 = vunpack.c.l.b16 %v721
        %v982 = vunpack.c.l.b16 %v722
        %v983 = vunpack.c.l.b16 %v723
        %v984 = vunpack.c.l.b16 %v724
        %v985 = vunpack.c.l.b16 %v725
        %v986 = vpack.c.b16 %v971, %v970
        %v987 = vpack.c.b16 %v973, %v972
        %v988 = vpack.c.b16 %v975, %v974
        %v989 = vpack.c.b16 %v977, %v976
        %v990 = vpack.c.b16 %v979, %v978
        %v991 = vpack.c.b16 %v981, %v980
        %v992 = vpack.c.b16 %v983, %v982
        %v993 = vpack.c.b16 %v985, %v984
        %1002 = vmatpush.bf16.msra.mxu0 %v993
        %1003 = vmatpush.bf16.msra.mxu0 %v992
        %1004 = vmatpush.bf16.msra.mxu0 %v991
        %1005 = vmatpush.bf16.msra.mxu0 %v990
        %1006 = vmatpush.bf16.msra.mxu0 %v989
        %1007 = vmatpush.bf16.msra.mxu0 %v988
        %1008 = vmatpush.bf16.msra.mxu0 %v987
        %1009 = vmatpush.bf16.msra.mxu0 %v986
        %1010 = vmatmul.bf16.gmra.mxu0 %v753
        %v1011 = vpop.f32.mrf.mxu0
        %v1012 = vadd.f32 %v841, %v1011
        %v1013 = vpop.f32.mrf.mxu0
        %v1014 = vadd.f32 %v843, %v1013
        %1015 = vmatmul.bf16.gmra.mxu0 %v754
        %v1016 = vpop.f32.mrf.mxu0
        %v1017 = vadd.f32 %v846, %v1016
        %v1018 = vpop.f32.mrf.mxu0
        %v1019 = vadd.f32 %v848, %v1018
        %1020 = vmatmul.bf16.gmra.mxu0 %v755
        %v1021 = vpop.f32.mrf.mxu0
        %v1022 = vadd.f32 %v851, %v1021
        %v1023 = vpop.f32.mrf.mxu0
        %1024 = vdwg.mxu0
        %v1025 = vadd.f32 %v1012, %v938
        %v1026 = vadd.f32 %v1014, %v940
        %v1027 = vadd.f32 %v1017, %v943
        %v1028 = vadd.f32 %v1019, %v945
        %v1029 = vadd.f32 %v1022, %v948
        %v1030 = vld [vmem:[#allocation10] sm:$0x1]
        %v1032 = vperm.slane %v1030, 0
        %v1034 = vadd.f32 %v1025, %v1032
        %v1035 = vadd.f32 %v1026, %v1032
        %v1036 = vadd.f32 %v1027, %v1032
        %v1037 = vadd.f32 %v1028, %v1032
        %v1038 = vadd.f32 %v1029, %v1032
        %v1039 = vmax.f32 %v1034, 0.0
        %v1040 = vmax.f32 %v1035, 0.0
        %v1041 = vmax.f32 %v1036, 0.0
        %v1042 = vmax.f32 %v1037, 0.0
        %v1043 = vmax.f32 %v1038, 0.0
        %v1044 = vpack.c.bf16 %v1039, %v1039
        %v1045 = vpack.c.bf16 %v1040, %v1040
        %v1046 = vpack.c.bf16 %v1041, %v1041
        %v1047 = vpack.c.bf16 %v1042, %v1042
        %v1048 = vpack.c.bf16 %v1043, %v1043
        %v1049 = vld [vmem:[#allocation11] sm:$0xf]
        %v1050 = vld [vmem:[#allocation11 + $0x4] sm:$0xf]
        %v1051 = vld [vmem:[#allocation11 + $0x8] sm:$0xf]
        %v1052 = vld [vmem:[#allocation11 + $0xc] sm:$0xf]
        %v1053 = vld [vmem:[#allocation11 + $0x10] sm:$0xf]
        %v1054 = vld [vmem:[#allocation11 + $0x14] sm:$0xf]
        %v1055 = vld [vmem:[#allocation11 + $0x18] sm:$0xf]
        %v1056 = vld [vmem:[#allocation11 + $0x1c] sm:$0xf]
        %v1057 = vld [vmem:[#allocation11 + $0x20] sm:$0xf]
        %v1058 = vld [vmem:[#allocation11 + $0x24] sm:$0xf]
        %v1059 = vld [vmem:[#allocation11 + $0x28] sm:$0xf]
        %v1060 = vld [vmem:[#allocation11 + $0x2c] sm:$0xf]
        %v1061 = vld [vmem:[#allocation11 + $0x30] sm:$0xf]
        %v1062 = vld [vmem:[#allocation11 + $0x34] sm:$0xf]
        %v1063 = vld [vmem:[#allocation11 + $0x38] sm:$0xf]
        %v1064 = vld [vmem:[#allocation11 + $0x3c] sm:$0xf]
        %s1065 = scalar_lea.vmem [#allocation11], 64
        %v1066 = vld [vmem:[%s1065] sm:$0xf]
        %v1067 = vld [vmem:[%s1065 + $0x4] sm:$0xf]
        %v1068 = vld [vmem:[%s1065 + $0x8] sm:$0xf]
        %v1069 = vld [vmem:[%s1065 + $0xc] sm:$0xf]
        %v1070 = vld [vmem:[%s1065 + $0x10] sm:$0xf]
        %v1071 = vld [vmem:[%s1065 + $0x14] sm:$0xf]
        %v1072 = vld [vmem:[%s1065 + $0x18] sm:$0xf]
        %v1073 = vld [vmem:[%s1065 + $0x1c] sm:$0xf]
        %v1074 = vld [vmem:[%s1065 + $0x20] sm:$0xf]
        %v1075 = vld [vmem:[%s1065 + $0x24] sm:$0xf]
        %v1076 = vld [vmem:[%s1065 + $0x28] sm:$0xf]
        %v1077 = vld [vmem:[%s1065 + $0x2c] sm:$0xf]
        %v1078 = vld [vmem:[%s1065 + $0x30] sm:$0xf]
        %v1079 = vld [vmem:[%s1065 + $0x34] sm:$0xf]
        %v1080 = vld [vmem:[%s1065 + $0x38] sm:$0xf]
        %v1081 = vld [vmem:[%s1065 + $0x3c] sm:$0xf]
        %v1087 = vunpack.c.l.b16 %v1044
        %v1088 = vunpack.c.l.b16 %v1045
        %v1089 = vunpack.c.l.b16 %v1046
        %v1090 = vunpack.c.l.b16 %v1047
        %v1091 = vunpack.c.l.b16 %v1048
        %v1092 = vpack.c.b16 %v1088, %v1087
        %v1093 = vpack.c.b16 %v1090, %v1089
        %v1094 = vpack.c.b16 %v1091, %v1091
        %v1096 = vshrl.u32 %v1092, 16
        %v1098 = vshll.u32 %v1092, 16
        %v1100 = vrot.slane %v1098, 1
        %v1101 = vor.u32 %v1096, %v1100
        %v1103 = vshll.u32 %v1093, 16
        %v1105 = vrot.slane %v1103, 1
        %v1106 = vsel %vm756, %v1101, %v1105
        %v1107 = vshrl.u32 %v1093, 16
        %v1109 = vor.u32 %v1107, %v1105
        %v1111 = vshll.u32 %v1094, 16
        %v1113 = vrot.slane %v1111, 1
        %v1114 = vsel %vm756, %v1109, %v1113
        %v1115 = vshrl.u32 %v1094, 16
        %v1117 = vor.u32 %v1115, %v1113
        %v1137 = vunpack.c.l.b16 %v1066
        %v1138 = vunpack.c.l.b16 %v1067
        %v1139 = vunpack.c.l.b16 %v1068
        %v1140 = vunpack.c.l.b16 %v1069
        %v1141 = vunpack.c.l.b16 %v1070
        %v1142 = vunpack.c.l.b16 %v1071
        %v1143 = vunpack.c.l.b16 %v1072
        %v1144 = vunpack.c.l.b16 %v1073
        %v1145 = vunpack.c.l.b16 %v1074
        %v1146 = vunpack.c.l.b16 %v1075
        %v1147 = vunpack.c.l.b16 %v1076
        %v1148 = vunpack.c.l.b16 %v1077
        %v1149 = vunpack.c.l.b16 %v1078
        %v1150 = vunpack.c.l.b16 %v1079
        %v1151 = vunpack.c.l.b16 %v1080
        %v1152 = vunpack.c.l.b16 %v1081
        %v1153 = vpack.c.b16 %v1138, %v1137
        %v1154 = vpack.c.b16 %v1140, %v1139
        %v1155 = vpack.c.b16 %v1142, %v1141
        %v1156 = vpack.c.b16 %v1144, %v1143
        %v1157 = vpack.c.b16 %v1146, %v1145
        %v1158 = vpack.c.b16 %v1148, %v1147
        %v1159 = vpack.c.b16 %v1150, %v1149
        %v1160 = vpack.c.b16 %v1152, %v1151
        %1169 = vmatpush.bf16.msra.mxu0 %v1160
        %1170 = vmatpush.bf16.msra.mxu0 %v1159
        %1171 = vmatpush.bf16.msra.mxu0 %v1158
        %1172 = vmatpush.bf16.msra.mxu0 %v1157
        %1173 = vmatpush.bf16.msra.mxu0 %v1156
        %1174 = vmatpush.bf16.msra.mxu0 %v1155
        %1175 = vmatpush.bf16.msra.mxu0 %v1154
        %1176 = vmatpush.bf16.msra.mxu0 %v1153
        %1177 = vmatmul.bf16.gmra.mxu0 %v1106
        %v1178 = vpop.f32.mrf.mxu0
        %v1179 = vadd.f32 0.0, %v1178
        %v1180 = vpop.f32.mrf.mxu0
        %v1181 = vadd.f32 0.0, %v1180
        %1182 = vmatmul.bf16.gmra.mxu0 %v1114
        %v1183 = vpop.f32.mrf.mxu0
        %v1184 = vadd.f32 0.0, %v1183
        %v1185 = vpop.f32.mrf.mxu0
        %v1186 = vadd.f32 0.0, %v1185
        %1187 = vmatmul.bf16.gmra.mxu0 %v1117
        %v1188 = vpop.f32.mrf.mxu0
        %v1189 = vadd.f32 0.0, %v1188
        %v1190 = vpop.f32.mrf.mxu0
        %1191 = vdwg.mxu0
        %s1192 = scalar_lea.vmem [#allocation11], 128
        %v1193 = vld [vmem:[%s1192] sm:$0xf]
        %v1194 = vld [vmem:[%s1192 + $0x4] sm:$0xf]
        %v1195 = vld [vmem:[%s1192 + $0x8] sm:$0xf]
        %v1196 = vld [vmem:[%s1192 + $0xc] sm:$0xf]
        %v1197 = vld [vmem:[%s1192 + $0x10] sm:$0xf]
        %v1198 = vld [vmem:[%s1192 + $0x14] sm:$0xf]
        %v1199 = vld [vmem:[%s1192 + $0x18] sm:$0xf]
        %v1200 = vld [vmem:[%s1192 + $0x1c] sm:$0xf]
        %v1201 = vld [vmem:[%s1192 + $0x20] sm:$0xf]
        %v1202 = vld [vmem:[%s1192 + $0x24] sm:$0xf]
        %v1203 = vld [vmem:[%s1192 + $0x28] sm:$0xf]
        %v1204 = vld [vmem:[%s1192 + $0x2c] sm:$0xf]
        %v1205 = vld [vmem:[%s1192 + $0x30] sm:$0xf]
        %v1206 = vld [vmem:[%s1192 + $0x34] sm:$0xf]
        %v1207 = vld [vmem:[%s1192 + $0x38] sm:$0xf]
        %v1208 = vld [vmem:[%s1192 + $0x3c] sm:$0xf]
        %v1209 = vrot.slane %v1092, 1
        %v1210 = vrot.slane %v1093, 1
        %v1211 = vsel %vm871, %v1209, %v1210
        %v1212 = vrot.slane %v1094, 1
        %v1213 = vsel %vm871, %v1210, %v1212
        %v1233 = vunpack.c.l.b16 %v1193
        %v1234 = vunpack.c.l.b16 %v1194
        %v1235 = vunpack.c.l.b16 %v1195
        %v1236 = vunpack.c.l.b16 %v1196
        %v1237 = vunpack.c.l.b16 %v1197
        %v1238 = vunpack.c.l.b16 %v1198
        %v1239 = vunpack.c.l.b16 %v1199
        %v1240 = vunpack.c.l.b16 %v1200
        %v1241 = vunpack.c.l.b16 %v1201
        %v1242 = vunpack.c.l.b16 %v1202
        %v1243 = vunpack.c.l.b16 %v1203
        %v1244 = vunpack.c.l.b16 %v1204
        %v1245 = vunpack.c.l.b16 %v1205
        %v1246 = vunpack.c.l.b16 %v1206
        %v1247 = vunpack.c.l.b16 %v1207
        %v1248 = vunpack.c.l.b16 %v1208
        %v1249 = vpack.c.b16 %v1234, %v1233
        %v1250 = vpack.c.b16 %v1236, %v1235
        %v1251 = vpack.c.b16 %v1238, %v1237
        %v1252 = vpack.c.b16 %v1240, %v1239
        %v1253 = vpack.c.b16 %v1242, %v1241
        %v1254 = vpack.c.b16 %v1244, %v1243
        %v1255 = vpack.c.b16 %v1246, %v1245
        %v1256 = vpack.c.b16 %v1248, %v1247
        %1265 = vmatpush.bf16.msra.mxu0 %v1256
        %1266 = vmatpush.bf16.msra.mxu0 %v1255
        %1267 = vmatpush.bf16.msra.mxu0 %v1254
        %1268 = vmatpush.bf16.msra.mxu0 %v1253
        %1269 = vmatpush.bf16.msra.mxu0 %v1252
        %1270 = vmatpush.bf16.msra.mxu0 %v1251
        %1271 = vmatpush.bf16.msra.mxu0 %v1250
        %1272 = vmatpush.bf16.msra.mxu0 %v1249
        %1273 = vmatmul.bf16.gmra.mxu0 %v1211
        %v1274 = vpop.f32.mrf.mxu0
        %v1275 = vadd.f32 0.0, %v1274
        %v1276 = vpop.f32.mrf.mxu0
        %v1277 = vadd.f32 0.0, %v1276
        %1278 = vmatmul.bf16.gmra.mxu0 %v1213
        %v1279 = vpop.f32.mrf.mxu0
        %v1280 = vadd.f32 0.0, %v1279
        %v1281 = vpop.f32.mrf.mxu0
        %v1282 = vadd.f32 0.0, %v1281
        %1283 = vmatmul.bf16.gmra.mxu0 %v1212
        %v1284 = vpop.f32.mrf.mxu0
        %v1285 = vadd.f32 0.0, %v1284
        %v1286 = vpop.f32.mrf.mxu0
        %1287 = vdwg.mxu0
        %v1307 = vunpack.c.l.b16 %v1049
        %v1308 = vunpack.c.l.b16 %v1050
        %v1309 = vunpack.c.l.b16 %v1051
        %v1310 = vunpack.c.l.b16 %v1052
        %v1311 = vunpack.c.l.b16 %v1053
        %v1312 = vunpack.c.l.b16 %v1054
        %v1313 = vunpack.c.l.b16 %v1055
        %v1314 = vunpack.c.l.b16 %v1056
        %v1315 = vunpack.c.l.b16 %v1057
        %v1316 = vunpack.c.l.b16 %v1058
        %v1317 = vunpack.c.l.b16 %v1059
        %v1318 = vunpack.c.l.b16 %v1060
        %v1319 = vunpack.c.l.b16 %v1061
        %v1320 = vunpack.c.l.b16 %v1062
        %v1321 = vunpack.c.l.b16 %v1063
        %v1322 = vunpack.c.l.b16 %v1064
        %v1323 = vpack.c.b16 %v1308, %v1307
        %v1324 = vpack.c.b16 %v1310, %v1309
        %v1325 = vpack.c.b16 %v1312, %v1311
        %v1326 = vpack.c.b16 %v1314, %v1313
        %v1327 = vpack.c.b16 %v1316, %v1315
        %v1328 = vpack.c.b16 %v1318, %v1317
        %v1329 = vpack.c.b16 %v1320, %v1319
        %v1330 = vpack.c.b16 %v1322, %v1321
        %1339 = vmatpush.bf16.msra.mxu0 %v1330
        %1340 = vmatpush.bf16.msra.mxu0 %v1329
        %1341 = vmatpush.bf16.msra.mxu0 %v1328
        %1342 = vmatpush.bf16.msra.mxu0 %v1327
        %1343 = vmatpush.bf16.msra.mxu0 %v1326
        %1344 = vmatpush.bf16.msra.mxu0 %v1325
        %1345 = vmatpush.bf16.msra.mxu0 %v1324
        %1346 = vmatpush.bf16.msra.mxu0 %v1323
        %1347 = vmatmul.bf16.gmra.mxu0 %v1092
        %v1348 = vpop.f32.mrf.mxu0
        %v1349 = vadd.f32 %v1179, %v1348
        %v1350 = vpop.f32.mrf.mxu0
        %v1351 = vadd.f32 %v1181, %v1350
        %1352 = vmatmul.bf16.gmra.mxu0 %v1093
        %v1353 = vpop.f32.mrf.mxu0
        %v1354 = vadd.f32 %v1184, %v1353
        %v1355 = vpop.f32.mrf.mxu0
        %v1356 = vadd.f32 %v1186, %v1355
        %1357 = vmatmul.bf16.gmra.mxu0 %v1094
        %v1358 = vpop.f32.mrf.mxu0
        %v1359 = vadd.f32 %v1189, %v1358
        %v1360 = vpop.f32.mrf.mxu0
        %1361 = vdwg.mxu0
        %v1362 = vadd.f32 %v1349, %v1275
        %v1363 = vadd.f32 %v1351, %v1277
        %v1364 = vadd.f32 %v1354, %v1280
        %v1365 = vadd.f32 %v1356, %v1282
        %v1366 = vadd.f32 %v1359, %v1285
        %v1367 = vld [vmem:[%s6] sm:$0x1]
        %v1369 = vperm.slane %v1367, 0
        %v1371 = vadd.f32 %v1362, %v1369
        %v1372 = vadd.f32 %v1363, %v1369
        %v1373 = vadd.f32 %v1364, %v1369
        %v1374 = vadd.f32 %v1365, %v1369
        %v1375 = vadd.f32 %v1366, %v1369
        %v1376 = vmax.f32 %v1371, 0.0
        %v1377 = vmax.f32 %v1372, 0.0
        %v1378 = vmax.f32 %v1373, 0.0
        %v1379 = vmax.f32 %v1374, 0.0
        %v1380 = vmax.f32 %v1375, 0.0
        %vm1381 = vcmask 1043456
        %v1382 = vsel %vm1381, %v1380, -inf
        %v1383 = vmax.f32 %v1376, %v1382
        %v1384 = vmax.f32 %v1383, %v1377
        %v1385 = vmax.f32 %v1378, %v1379
        %v1386 = vmax.f32 %v1384, %v1385
        %v1387 = vrot.slane %v1386, 4
        %v1388 = vmax.f32 %v1386, %v1387
        %v1389 = vrot.slane %v1388, 2
        %v1390 = vmax.f32 %v1388, %v1389
        %v1391 = vrot.slane %v1390, 1
        %v1392 = vmax.f32 %v1390, %v1391
        %v1393 = vpack.c.bf16 %v1392, %v1392
        %v1394 = vld [vmem:[#allocation13] sm:$0xff]
        %v1395 = vld [vmem:[#allocation13 + $0x8] sm:$0xff]
        %v1396 = vld [vmem:[#allocation13 + $0x10] sm:$0xff]
        %v1397 = vld [vmem:[#allocation13 + $0x18] sm:$0xff]
        %v1398 = vld [vmem:[#allocation13 + $0x20] sm:$0xff]
        %v1399 = vld [vmem:[#allocation13 + $0x28] sm:$0xff]
        %v1400 = vld [vmem:[#allocation13 + $0x30] sm:$0xff]
        %v1401 = vld [vmem:[#allocation13 + $0x38] sm:$0xff]
        %v1402 = vld [vmem:[#allocation13 + $0x40] sm:$0xff]
        %v1403 = vld [vmem:[#allocation13 + $0x48] sm:$0xff]
        %v1404 = vld [vmem:[#allocation13 + $0x50] sm:$0xff]
        %v1405 = vld [vmem:[#allocation13 + $0x58] sm:$0xff]
        %v1406 = vld [vmem:[#allocation13 + $0x60] sm:$0xff]
        %v1407 = vld [vmem:[#allocation13 + $0x68] sm:$0xff]
        %v1408 = vld [vmem:[#allocation13 + $0x70] sm:$0xff]
        %v1409 = vld [vmem:[#allocation13 + $0x78] sm:$0xff]
        %v1410 = vld [vmem:[%s8] sm:$0x3]
        %v1427 = vunpack.c.l.b16 %v1394
        %v1428 = vunpack.c.h.b16 %v1394
        %v1429 = vunpack.c.l.b16 %v1395
        %v1430 = vunpack.c.h.b16 %v1395
        %v1431 = vunpack.c.l.b16 %v1396
        %v1432 = vunpack.c.h.b16 %v1396
        %v1433 = vunpack.c.l.b16 %v1397
        %v1434 = vunpack.c.h.b16 %v1397
        %v1435 = vunpack.c.l.b16 %v1398
        %v1436 = vunpack.c.h.b16 %v1398
        %v1437 = vunpack.c.l.b16 %v1399
        %v1438 = vunpack.c.h.b16 %v1399
        %v1439 = vunpack.c.l.b16 %v1400
        %v1440 = vunpack.c.h.b16 %v1400
        %v1441 = vunpack.c.l.b16 %v1401
        %v1442 = vunpack.c.h.b16 %v1401
        %v1443 = vunpack.c.l.b16 %v1402
        %v1444 = vunpack.c.h.b16 %v1402
        %v1445 = vunpack.c.l.b16 %v1403
        %v1446 = vunpack.c.h.b16 %v1403
        %v1447 = vunpack.c.l.b16 %v1404
        %v1448 = vunpack.c.h.b16 %v1404
        %v1449 = vunpack.c.l.b16 %v1405
        %v1450 = vunpack.c.h.b16 %v1405
        %v1451 = vunpack.c.l.b16 %v1406
        %v1452 = vunpack.c.h.b16 %v1406
        %v1453 = vunpack.c.l.b16 %v1407
        %v1454 = vunpack.c.h.b16 %v1407
        %v1455 = vunpack.c.l.b16 %v1408
        %v1456 = vunpack.c.h.b16 %v1408
        %v1457 = vunpack.c.l.b16 %v1409
        %v1458 = vunpack.c.h.b16 %v1409
        %v1459 = vpack.c.b16 %v1429, %v1427
        %v1460 = vpack.c.b16 %v1430, %v1428
        %v1461 = vpack.c.b16 %v1433, %v1431
        %v1462 = vpack.c.b16 %v1434, %v1432
        %v1463 = vpack.c.b16 %v1437, %v1435
        %v1464 = vpack.c.b16 %v1438, %v1436
        %v1465 = vpack.c.b16 %v1441, %v1439
        %v1466 = vpack.c.b16 %v1442, %v1440
        %v1467 = vpack.c.b16 %v1445, %v1443
        %v1468 = vpack.c.b16 %v1446, %v1444
        %v1469 = vpack.c.b16 %v1449, %v1447
        %v1470 = vpack.c.b16 %v1450, %v1448
        %v1471 = vpack.c.b16 %v1453, %v1451
        %v1472 = vpack.c.b16 %v1454, %v1452
        %v1473 = vpack.c.b16 %v1457, %v1455
        %v1474 = vpack.c.b16 %v1458, %v1456
        %v1492 = vperm.slane %v1410, 0
        %v1493 = vperm.slane %v1410, 1
        %1496 = vmatpush.bf16.msra.mxu0 %v1473
        %1497 = vmatpush.bf16.msra.mxu0 %v1471
        %1498 = vmatpush.bf16.msra.mxu0 %v1469
        %1499 = vmatpush.bf16.msra.mxu0 %v1467
        %1500 = vmatpush.bf16.msra.mxu0 %v1465
        %1501 = vmatpush.bf16.msra.mxu0 %v1463
        %1502 = vmatpush.bf16.msra.mxu0 %v1461
        %1503 = vmatpush.bf16.msra.mxu0 %v1459
        %1504 = vmatmul.bf16.gmra.mxu0 %v1393
        %v1505 = vpop.f32.mrf.mxu0
        %v1506 = vadd.f32 %v1492, %v1505
        %v1507 = vpop.f32.mrf.mxu0
        %1508 = vdwg.mxu0
        %1509 = vmatpush.bf16.msra.mxu0 %v1474
        %1510 = vmatpush.bf16.msra.mxu0 %v1472
        %1511 = vmatpush.bf16.msra.mxu0 %v1470
        %1512 = vmatpush.bf16.msra.mxu0 %v1468
        %1513 = vmatpush.bf16.msra.mxu0 %v1466
        %1514 = vmatpush.bf16.msra.mxu0 %v1464
        %1515 = vmatpush.bf16.msra.mxu0 %v1462
        %1516 = vmatpush.bf16.msra.mxu0 %v1460
        %1517 = vmatmul.bf16.gmra.mxu0 %v1393
        %v1518 = vpop.f32.mrf.mxu0
        %v1519 = vadd.f32 %v1493, %v1518
        %v1520 = vpop.f32.mrf.mxu0
        %1521 = vdwg.mxu0
        %v1522 = vmax.f32 %v1506, 0.0
        %v1523 = vmax.f32 %v1519, 0.0
        %v1524 = vpack.c.bf16 %v1522, %v1522
        %v1525 = vpack.c.bf16 %v1523, %v1523
        %v1526 = vld [vmem:[#allocation14] sm:$0xff]
        %v1527 = vld [vmem:[#allocation14 + $0x8] sm:$0xff]
        %v1528 = vld [vmem:[#allocation14 + $0x10] sm:$0xff]
        %v1529 = vld [vmem:[#allocation14 + $0x18] sm:$0xff]
        %v1530 = vld [vmem:[#allocation14 + $0x20] sm:$0xff]
        %v1531 = vld [vmem:[#allocation14 + $0x28] sm:$0xff]
        %v1532 = vld [vmem:[#allocation14 + $0x30] sm:$0xff]
        %v1533 = vld [vmem:[#allocation14 + $0x38] sm:$0xff]
        %v1534 = vld [vmem:[#allocation14 + $0x40] sm:$0xff]
        %v1535 = vld [vmem:[#allocation14 + $0x48] sm:$0xff]
        %v1536 = vld [vmem:[#allocation14 + $0x50] sm:$0xff]
        %v1537 = vld [vmem:[#allocation14 + $0x58] sm:$0xff]
        %v1538 = vld [vmem:[#allocation14 + $0x60] sm:$0xff]
        %v1539 = vld [vmem:[#allocation14 + $0x68] sm:$0xff]
        %v1540 = vld [vmem:[#allocation14 + $0x70] sm:$0xff]
        %v1541 = vld [vmem:[#allocation14 + $0x78] sm:$0xff]
        %v1542 = vld [vmem:[#allocation14 + $0x80] sm:$0xff]
        %v1543 = vld [vmem:[#allocation14 + $0x88] sm:$0xff]
        %v1544 = vld [vmem:[#allocation14 + $0x90] sm:$0xff]
        %v1545 = vld [vmem:[#allocation14 + $0x98] sm:$0xff]
        %v1546 = vld [vmem:[#allocation14 + $0xa0] sm:$0xff]
        %v1547 = vld [vmem:[#allocation14 + $0xa8] sm:$0xff]
        %v1548 = vld [vmem:[#allocation14 + $0xb0] sm:$0xff]
        %v1549 = vld [vmem:[#allocation14 + $0xb8] sm:$0xff]
        %v1550 = vld [vmem:[#allocation14 + $0xc0] sm:$0xff]
        %v1551 = vld [vmem:[#allocation14 + $0xc8] sm:$0xff]
        %v1552 = vld [vmem:[#allocation14 + $0xd0] sm:$0xff]
        %v1553 = vld [vmem:[#allocation14 + $0xd8] sm:$0xff]
        %v1554 = vld [vmem:[#allocation14 + $0xe0] sm:$0xff]
        %v1555 = vld [vmem:[#allocation14 + $0xe8] sm:$0xff]
        %v1556 = vld [vmem:[#allocation14 + $0xf0] sm:$0xff]
        %v1557 = vld [vmem:[#allocation14 + $0xf8] sm:$0xff]
        %v1558 = vld [vmem:[%s10] sm:$0x3]
        %v1591 = vunpack.c.l.b16 %v1526
        %v1592 = vunpack.c.h.b16 %v1526
        %v1593 = vunpack.c.l.b16 %v1527
        %v1594 = vunpack.c.h.b16 %v1527
        %v1595 = vunpack.c.l.b16 %v1528
        %v1596 = vunpack.c.h.b16 %v1528
        %v1597 = vunpack.c.l.b16 %v1529
        %v1598 = vunpack.c.h.b16 %v1529
        %v1599 = vunpack.c.l.b16 %v1530
        %v1600 = vunpack.c.h.b16 %v1530
        %v1601 = vunpack.c.l.b16 %v1531
        %v1602 = vunpack.c.h.b16 %v1531
        %v1603 = vunpack.c.l.b16 %v1532
        %v1604 = vunpack.c.h.b16 %v1532
        %v1605 = vunpack.c.l.b16 %v1533
        %v1606 = vunpack.c.h.b16 %v1533
        %v1607 = vunpack.c.l.b16 %v1534
        %v1608 = vunpack.c.h.b16 %v1534
        %v1609 = vunpack.c.l.b16 %v1535
        %v1610 = vunpack.c.h.b16 %v1535
        %v1611 = vunpack.c.l.b16 %v1536
        %v1612 = vunpack.c.h.b16 %v1536
        %v1613 = vunpack.c.l.b16 %v1537
        %v1614 = vunpack.c.h.b16 %v1537
        %v1615 = vunpack.c.l.b16 %v1538
        %v1616 = vunpack.c.h.b16 %v1538
        %v1617 = vunpack.c.l.b16 %v1539
        %v1618 = vunpack.c.h.b16 %v1539
        %v1619 = vunpack.c.l.b16 %v1540
        %v1620 = vunpack.c.h.b16 %v1540
        %v1621 = vunpack.c.l.b16 %v1541
        %v1622 = vunpack.c.h.b16 %v1541
        %v1623 = vunpack.c.l.b16 %v1542
        %v1624 = vunpack.c.h.b16 %v1542
        %v1625 = vunpack.c.l.b16 %v1543
        %v1626 = vunpack.c.h.b16 %v1543
        %v1627 = vunpack.c.l.b16 %v1544
        %v1628 = vunpack.c.h.b16 %v1544
        %v1629 = vunpack.c.l.b16 %v1545
        %v1630 = vunpack.c.h.b16 %v1545
        %v1631 = vunpack.c.l.b16 %v1546
        %v1632 = vunpack.c.h.b16 %v1546
        %v1633 = vunpack.c.l.b16 %v1547
        %v1634 = vunpack.c.h.b16 %v1547
        %v1635 = vunpack.c.l.b16 %v1548
        %v1636 = vunpack.c.h.b16 %v1548
        %v1637 = vunpack.c.l.b16 %v1549
        %v1638 = vunpack.c.h.b16 %v1549
        %v1639 = vunpack.c.l.b16 %v1550
        %v1640 = vunpack.c.h.b16 %v1550
        %v1641 = vunpack.c.l.b16 %v1551
        %v1642 = vunpack.c.h.b16 %v1551
        %v1643 = vunpack.c.l.b16 %v1552
        %v1644 = vunpack.c.h.b16 %v1552
        %v1645 = vunpack.c.l.b16 %v1553
        %v1646 = vunpack.c.h.b16 %v1553
        %v1647 = vunpack.c.l.b16 %v1554
        %v1648 = vunpack.c.h.b16 %v1554
        %v1649 = vunpack.c.l.b16 %v1555
        %v1650 = vunpack.c.h.b16 %v1555
        %v1651 = vunpack.c.l.b16 %v1556
        %v1652 = vunpack.c.h.b16 %v1556
        %v1653 = vunpack.c.l.b16 %v1557
        %v1654 = vunpack.c.h.b16 %v1557
        %v1655 = vpack.c.b16 %v1593, %v1591
        %v1656 = vpack.c.b16 %v1594, %v1592
        %v1657 = vpack.c.b16 %v1597, %v1595
        %v1658 = vpack.c.b16 %v1598, %v1596
        %v1659 = vpack.c.b16 %v1601, %v1599
        %v1660 = vpack.c.b16 %v1602, %v1600
        %v1661 = vpack.c.b16 %v1605, %v1603
        %v1662 = vpack.c.b16 %v1606, %v1604
        %v1663 = vpack.c.b16 %v1609, %v1607
        %v1664 = vpack.c.b16 %v1610, %v1608
        %v1665 = vpack.c.b16 %v1613, %v1611
        %v1666 = vpack.c.b16 %v1614, %v1612
        %v1667 = vpack.c.b16 %v1617, %v1615
        %v1668 = vpack.c.b16 %v1618, %v1616
        %v1669 = vpack.c.b16 %v1621, %v1619
        %v1670 = vpack.c.b16 %v1622, %v1620
        %v1671 = vpack.c.b16 %v1625, %v1623
        %v1672 = vpack.c.b16 %v1626, %v1624
        %v1673 = vpack.c.b16 %v1629, %v1627
        %v1674 = vpack.c.b16 %v1630, %v1628
        %v1675 = vpack.c.b16 %v1633, %v1631
        %v1676 = vpack.c.b16 %v1634, %v1632
        %v1677 = vpack.c.b16 %v1637, %v1635
        %v1678 = vpack.c.b16 %v1638, %v1636
        %v1679 = vpack.c.b16 %v1641, %v1639
        %v1680 = vpack.c.b16 %v1642, %v1640
        %v1681 = vpack.c.b16 %v1645, %v1643
        %v1682 = vpack.c.b16 %v1646, %v1644
        %v1683 = vpack.c.b16 %v1649, %v1647
        %v1684 = vpack.c.b16 %v1650, %v1648
        %v1685 = vpack.c.b16 %v1653, %v1651
        %v1686 = vpack.c.b16 %v1654, %v1652
        %v1720 = vperm.slane %v1558, 0
        %v1721 = vperm.slane %v1558, 1
        %1724 = vmatpush.bf16.msra.mxu0 %v1669
        %1725 = vmatpush.bf16.msra.mxu0 %v1667
        %1726 = vmatpush.bf16.msra.mxu0 %v1665
        %1727 = vmatpush.bf16.msra.mxu0 %v1663
        %1728 = vmatpush.bf16.msra.mxu0 %v1661
        %1729 = vmatpush.bf16.msra.mxu0 %v1659
        %1730 = vmatpush.bf16.msra.mxu0 %v1657
        %1731 = vmatpush.bf16.msra.mxu0 %v1655
        %1732 = vmatmul.bf16.gmra.mxu0 %v1524
        %v1733 = vpop.f32.mrf.mxu0
        %v1734 = vadd.f32 %v1720, %v1733
        %v1735 = vpop.f32.mrf.mxu0
        %1736 = vdwg.mxu0
        %1737 = vmatpush.bf16.msra.mxu0 %v1685
        %1738 = vmatpush.bf16.msra.mxu0 %v1683
        %1739 = vmatpush.bf16.msra.mxu0 %v1681
        %1740 = vmatpush.bf16.msra.mxu0 %v1679
        %1741 = vmatpush.bf16.msra.mxu0 %v1677
        %1742 = vmatpush.bf16.msra.mxu0 %v1675
        %1743 = vmatpush.bf16.msra.mxu0 %v1673
        %1744 = vmatpush.bf16.msra.mxu0 %v1671
        %1745 = vmatmul.bf16.gmra.mxu0 %v1525
        %v1746 = vpop.f32.mrf.mxu0
        %v1747 = vadd.f32 %v1734, %v1746
        %v1748 = vpop.f32.mrf.mxu0
        %1749 = vdwg.mxu0
        %1750 = vmatpush.bf16.msra.mxu0 %v1670
        %1751 = vmatpush.bf16.msra.mxu0 %v1668
        %1752 = vmatpush.bf16.msra.mxu0 %v1666
        %1753 = vmatpush.bf16.msra.mxu0 %v1664
        %1754 = vmatpush.bf16.msra.mxu0 %v1662
        %1755 = vmatpush.bf16.msra.mxu0 %v1660
        %1756 = vmatpush.bf16.msra.mxu0 %v1658
        %1757 = vmatpush.bf16.msra.mxu0 %v1656
        %1758 = vmatmul.bf16.gmra.mxu0 %v1524
        %v1759 = vpop.f32.mrf.mxu0
        %v1760 = vadd.f32 %v1721, %v1759
        %v1761 = vpop.f32.mrf.mxu0
        %1762 = vdwg.mxu0
        %1763 = vmatpush.bf16.msra.mxu0 %v1686
        %1764 = vmatpush.bf16.msra.mxu0 %v1684
        %1765 = vmatpush.bf16.msra.mxu0 %v1682
        %1766 = vmatpush.bf16.msra.mxu0 %v1680
        %1767 = vmatpush.bf16.msra.mxu0 %v1678
        %1768 = vmatpush.bf16.msra.mxu0 %v1676
        %1769 = vmatpush.bf16.msra.mxu0 %v1674
        %1770 = vmatpush.bf16.msra.mxu0 %v1672
        %1771 = vmatmul.bf16.gmra.mxu0 %v1525
        %v1772 = vpop.f32.mrf.mxu0
        %v1773 = vadd.f32 %v1760, %v1772
        %v1774 = vpop.f32.mrf.mxu0
        %1775 = vdwg.mxu0
        %v1776 = vmax.f32 %v1747, 0.0
        %v1777 = vmax.f32 %v1773, 0.0
        %v1778 = vpack.c.bf16 %v1776, %v1776
        %v1779 = vpack.c.bf16 %v1777, %v1777
        %v1780 = vld [vmem:[#allocation16] sm:$0xf]
        %v1781 = vld [vmem:[#allocation16 + $0x4] sm:$0xf]
        %v1782 = vld [vmem:[#allocation16 + $0x8] sm:$0xf]
        %v1783 = vld [vmem:[#allocation16 + $0xc] sm:$0xf]
        %v1784 = vld [vmem:[#allocation16 + $0x10] sm:$0xf]
        %v1785 = vld [vmem:[#allocation16 + $0x14] sm:$0xf]
        %v1786 = vld [vmem:[#allocation16 + $0x18] sm:$0xf]
        %v1787 = vld [vmem:[#allocation16 + $0x1c] sm:$0xf]
        %v1788 = vld [vmem:[#allocation16 + $0x20] sm:$0xf]
        %v1789 = vld [vmem:[#allocation16 + $0x24] sm:$0xf]
        %v1790 = vld [vmem:[#allocation16 + $0x28] sm:$0xf]
        %v1791 = vld [vmem:[#allocation16 + $0x2c] sm:$0xf]
        %v1792 = vld [vmem:[#allocation16 + $0x30] sm:$0xf]
        %v1793 = vld [vmem:[#allocation16 + $0x34] sm:$0xf]
        %v1794 = vld [vmem:[#allocation16 + $0x38] sm:$0xf]
        %v1795 = vld [vmem:[#allocation16 + $0x3c] sm:$0xf]
        %v1796 = vld [vmem:[#allocation16 + $0x40] sm:$0xf]
        %v1797 = vld [vmem:[#allocation16 + $0x44] sm:$0xf]
        %v1798 = vld [vmem:[#allocation16 + $0x48] sm:$0xf]
        %v1799 = vld [vmem:[#allocation16 + $0x4c] sm:$0xf]
        %v1800 = vld [vmem:[#allocation16 + $0x50] sm:$0xf]
        %v1801 = vld [vmem:[#allocation16 + $0x54] sm:$0xf]
        %v1802 = vld [vmem:[#allocation16 + $0x58] sm:$0xf]
        %v1803 = vld [vmem:[#allocation16 + $0x5c] sm:$0xf]
        %v1804 = vld [vmem:[#allocation16 + $0x60] sm:$0xf]
        %v1805 = vld [vmem:[#allocation16 + $0x64] sm:$0xf]
        %v1806 = vld [vmem:[#allocation16 + $0x68] sm:$0xf]
        %v1807 = vld [vmem:[#allocation16 + $0x6c] sm:$0xf]
        %v1808 = vld [vmem:[#allocation16 + $0x70] sm:$0xf]
        %v1809 = vld [vmem:[#allocation16 + $0x74] sm:$0xf]
        %v1810 = vld [vmem:[#allocation16 + $0x78] sm:$0xf]
        %v1811 = vld [vmem:[#allocation16 + $0x7c] sm:$0xf]
        %v1812 = vld [vmem:[%s12] sm:$0x1]
        %v1845 = vunpack.c.l.b16 %v1780
        %v1846 = vunpack.c.l.b16 %v1781
        %v1847 = vunpack.c.l.b16 %v1782
        %v1848 = vunpack.c.l.b16 %v1783
        %v1849 = vunpack.c.l.b16 %v1784
        %v1850 = vunpack.c.l.b16 %v1785
        %v1851 = vunpack.c.l.b16 %v1786
        %v1852 = vunpack.c.l.b16 %v1787
        %v1853 = vunpack.c.l.b16 %v1788
        %v1854 = vunpack.c.l.b16 %v1789
        %v1855 = vunpack.c.l.b16 %v1790
        %v1856 = vunpack.c.l.b16 %v1791
        %v1857 = vunpack.c.l.b16 %v1792
        %v1858 = vunpack.c.l.b16 %v1793
        %v1859 = vunpack.c.l.b16 %v1794
        %v1860 = vunpack.c.l.b16 %v1795
        %v1861 = vunpack.c.l.b16 %v1796
        %v1862 = vunpack.c.l.b16 %v1797
        %v1863 = vunpack.c.l.b16 %v1798
        %v1864 = vunpack.c.l.b16 %v1799
        %v1865 = vunpack.c.l.b16 %v1800
        %v1866 = vunpack.c.l.b16 %v1801
        %v1867 = vunpack.c.l.b16 %v1802
        %v1868 = vunpack.c.l.b16 %v1803
        %v1869 = vunpack.c.l.b16 %v1804
        %v1870 = vunpack.c.l.b16 %v1805
        %v1871 = vunpack.c.l.b16 %v1806
        %v1872 = vunpack.c.l.b16 %v1807
        %v1873 = vunpack.c.l.b16 %v1808
        %v1874 = vunpack.c.l.b16 %v1809
        %v1875 = vunpack.c.l.b16 %v1810
        %v1876 = vunpack.c.l.b16 %v1811
        %v1877 = vpack.c.b16 %v1846, %v1845
        %v1878 = vpack.c.b16 %v1848, %v1847
        %v1879 = vpack.c.b16 %v1850, %v1849
        %v1880 = vpack.c.b16 %v1852, %v1851
        %v1881 = vpack.c.b16 %v1854, %v1853
        %v1882 = vpack.c.b16 %v1856, %v1855
        %v1883 = vpack.c.b16 %v1858, %v1857
        %v1884 = vpack.c.b16 %v1860, %v1859
        %v1885 = vpack.c.b16 %v1862, %v1861
        %v1886 = vpack.c.b16 %v1864, %v1863
        %v1887 = vpack.c.b16 %v1866, %v1865
        %v1888 = vpack.c.b16 %v1868, %v1867
        %v1889 = vpack.c.b16 %v1870, %v1869
        %v1890 = vpack.c.b16 %v1872, %v1871
        %v1891 = vpack.c.b16 %v1874, %v1873
        %v1892 = vpack.c.b16 %v1876, %v1875
        %1909 = vmatpush.bf16.msra.mxu0 %v1884
        %1910 = vmatpush.bf16.msra.mxu0 %v1883
        %1911 = vmatpush.bf16.msra.mxu0 %v1882
        %1912 = vmatpush.bf16.msra.mxu0 %v1881
        %1913 = vmatpush.bf16.msra.mxu0 %v1880
        %1914 = vmatpush.bf16.msra.mxu0 %v1879
        %1915 = vmatpush.bf16.msra.mxu0 %v1878
        %1916 = vmatpush.bf16.msra.mxu0 %v1877
        %1917 = vmatmul.bf16.gmra.mxu0 %v1778
        %v1918 = vpop.f32.mrf.mxu0
        %v1919 = vadd.f32 %v1812, %v1918
        %v1920 = vpop.f32.mrf.mxu0
        %1921 = vdwg.mxu0
        %1922 = vmatpush.bf16.msra.mxu0 %v1892
        %1923 = vmatpush.bf16.msra.mxu0 %v1891
        %1924 = vmatpush.bf16.msra.mxu0 %v1890
        %1925 = vmatpush.bf16.msra.mxu0 %v1889
        %1926 = vmatpush.bf16.msra.mxu0 %v1888
        %1927 = vmatpush.bf16.msra.mxu0 %v1887
        %1928 = vmatpush.bf16.msra.mxu0 %v1886
        %1929 = vmatpush.bf16.msra.mxu0 %v1885
        %1930 = vmatmul.bf16.gmra.mxu0 %v1779
        %v1931 = vpop.f32.mrf.mxu0
        %v1932 = vadd.f32 %v1919, %v1931
        %v1933 = vpop.f32.mrf.mxu0
        %1934 = vdwg.mxu0
        %v1935 = vmax.f32 %v1932, -30.0
        %v1936 = vmin.f32 %v1935, 30.0
        %v1937 = vsub.f32 0.0, %v1936
        %v1938 = vmul.f32 %v1937, 1.442695
        %v1939 = vpow.pop %v1938
        %v1940 = vadd.f32 %v1939, 1.0
        %v1941 = vrcp.pop %v1940
        %v1942 = vmul.f32 %v1940, %v1941
        %v1943 = vsub.f32 1.0, %v1942
        %v1944 = vmul.f32 %v1941, %v1943
        %v1945 = vadd.f32 %v1941, %v1944
        %vm1946 = vweird.f32 %v1940
        %vm1947 = vweird.f32 %v1941
        %vm1948 = vmor %vm1946, %vm1947
        %v1949 = vsel %vm1948, %v1941, %v1945
        %v1950 = vand.u32 2147483647, %v1940
        %vm1951 = vcmp.eq.f32.partialorder %v1950, 8.507059e+37
        %v1952 = vand.u32 %v1940, 2147483648
        %v1953 = vor.u32 1.1754944e-38, %v1952
        %v1954 = vsel %vm1951, %v1953, %v1949
        %v1955 = vmul.f32 1.0, %v1954
        %1956 = vst [vmem:[%s587] sm:$0x1] %v1955
        %s1957 = sand.u32 %s320, 1
        %s1958 = scalar_lea.sflag [#allocation4], %s1957
        %s1959 = sand.u32 %s320, 1
        %s1960 = scalar_lea.vmem [#allocation17], %s1959
        // Predicated region
        $region109: #{tpu_custom_call.1} parent=71 // pred_check
          %p1961 = pneg %p330
        $region110: #{tpu_custom_call.1} parent=71 // pred_check_branch
          %1963 = sbr.rel (%p1961) target = $region112
        $region111: #{tpu_custom_call.1} parent=71 // pred_region
          %1965 = vsyncadd %s1958, 0
          %s1966 = scalar_lea.hbm %s13, %s34
          %s1968 = sshll.u32 %s1960, 4
          %s1969 = int_to_ptr.vmem [resolvable:$true] %s1968
          %s1970 = sshll.u32 %s1966, 4
          %s1971 = int_to_ptr.hbm [resolvable:$true] %s1970
          %1973 = dma.vmem_to_hbm [thread:$0]  %s1969, 16, %s1971, %s1958
        $region112: #{tpu_custom_call.1} parent=71 // pred_fallthru
          _
      $region72: #{tpu_custom_call.1} parent=5 // pred_fallthru
        _
      %p1974 = scmp.le.s32.totalorder 2, %s29
      // Predicated region
      $region113: #{tpu_custom_call.1} parent=5 // pred_check
        %p1975 = pneg %p1974
      $region114: #{tpu_custom_call.1} parent=5 // pred_check_branch
        %1977 = sbr.rel (%p1975) target = $region116
      $region115: #{tpu_custom_call.1} parent=5 // pred_region
        %s1978 = ssub.s32 %s29, 2
        // Predicated region
        $region117: #{tpu_custom_call.1} parent=115 // pred_check
          %p1979 = pneg %p336
        $region118: #{tpu_custom_call.1} parent=115 // pred_check_branch
          %1981 = sbr.rel (%p1979) target = $region120
        $region119: #{tpu_custom_call.1} parent=115 // pred_region
          %s1982 = sand.u32 %s321, 1
          %s1983 = scalar_lea.sflag [#allocation4], %s1982
          %s1984 = sand.u32 %s321, 1
          %s1985 = scalar_lea.vmem [#allocation17], %s1984
          %1987 = dma.done %s1983, 16
        $region120: #{tpu_custom_call.1} parent=115 // pred_fallthru
          _
      $region116: #{tpu_custom_call.1} parent=5 // pred_fallthru
        _
    $region6: #{tpu_custom_call.1} parent=1 // loop_footer
      %s33 = sadd.s32 1, %s29
    $region7: #{tpu_custom_call.1} parent=1 // loop_footer_branch
      %28 = sbr.rel target = $region3
    $region8: #{tpu_custom_call.1} parent=1 // loop_exit
      _
    %1988 = vsyncpa [#allocation3], 1
    %s1989 = scalar_lea.sflag [#allocation3], 1
    %1990 = vsyncpa %s1989, 1
    %1991 = vsyncpa [#allocation6], 1
    %1992 = vsyncpa [#allocation9], 1
    %1993 = vsyncpa [#allocation12], 1
    %1994 = vsyncpa [#allocation15], 1
    %1995 = vsyncpa [#allocation4], 1
    %s1996 = scalar_lea.sflag [#allocation4], 1
    %1997 = vsyncpa %s1996, 1

</llo_original>
